<compile_context>
chip_gen: v6e
topology: v6e:2x2x1
jax: 0.10.0
libtpu: 0.0.40
codegen_flags: <defaults>
</compile_context>

<pallas_src>
import jax
import jax.numpy as jnp
import numpy as np
from jax import lax
from jax.experimental import pallas as pl
from jax.experimental.pallas import tpu as pltpu

SELECT_EXPERT = 8
ROUTE_SCALE = 1.0

_FALLBACK_VMEM_BYTES = 64 * 1024 * 1024  # v7x per-core VMEM = smallest across v5e/v6e/v7x


# --------------------------------------------------------------------------- #
# Kernel
# --------------------------------------------------------------------------- #
def gate_kernel(x_ref, w_ref, b_ref, w_out_ref, idx_out_ref):
    # x_ref: (tm, D)   w_ref: (E, D)   b_ref: (E, 1)
    # w_out_ref: (tm, K) in x.dtype    idx_out_ref: (tm, K) int32

    # ---- linear: contract D of (E, D) and (tm, D) -> (E, tm) on the MXU ----
    # No operand casts: bf16/f32 operands are fed natively, f32 accumulation.
    logits = lax.dot_general(
        w_ref[...], x_ref[...],
        dimension_numbers=(((1,), (1,)), ((), ())),
        preferred_element_type=jnp.float32,
    )  # (E, tm) f32

    # ---- softmax over the expert (sublane) axis ----
    m0 = jnp.max(logits, axis=0, keepdims=True)                      # (1, tm)
    e = jnp.exp(logits - m0)
    inv_den = pl.reciprocal(jnp.sum(e, axis=0, keepdims=True), approx=False)
    score = e * inv_den                                              # (E, tm)

    # ---- bias add: (E, 1) broadcast over token lanes ----
    score = score + b_ref[...].astype(jnp.float32)

    num_experts, tm = score.shape
    k_sel = w_out_ref.shape[1]
    row = lax.broadcasted_iota(jnp.int32, (num_experts, tm), 0)      # hoisted out of k-loop
    work = score
    neg_inf = jnp.float32(-jnp.inf)

    # ---- iterative top-k over sublanes (k = SELECT_EXPERT, unrolled) ----
    # Each step: column max (exact value), first sublane index attaining it
    # (matches lax.top_k / torch.topk tie-breaking), then mask it out.
    vals = []
    idxs = []
    for _ in range(k_sel):
        m = jnp.max(work, axis=0, keepdims=True)                                  # (1, tm)
        idx = jnp.min(jnp.where(work == m, row, num_experts), axis=0,
                      keepdims=True)                                              # (1, tm)
        vals.append(m)
        idxs.append(idx)
        work = jnp.where(row == idx, neg_inf, work)

    weights_kt = jnp.concatenate(vals, axis=0)                                    # (K, tm) f32
    indices_kt = jnp.concatenate(idxs, axis=0)                                    # (K, tm) int32
    if ROUTE_SCALE != 1.0:
        weights_kt = weights_kt * jnp.float32(ROUTE_SCALE)

    # On-chip transpose to the module's (tokens, K) layout: avoids a separate
    # XLA transpose pass over the (T, 8) outputs in HBM.
    w_out_ref[...] = weights_kt.T.astype(w_out_ref.dtype)                         # (tm, K)
    idx_out_ref[...] = indices_kt.T.astype(jnp.int32)                             # (tm, K)


# --------------------------------------------------------------------------- #
# Tiling / VMEM sizing (generation aware)
# --------------------------------------------------------------------------- #
def _round_up(a, m):
    return ((a + m - 1) // m) * m


def _vmem_capacity_bytes():
    try:
        return int(pltpu.get_tpu_info().vmem_capacity_bytes)
    except Exception:
        return _FALLBACK_VMEM_BYTES


def _vmem_estimate(tm, dim, num_experts, x_itemsize, w_itemsize):
    """Conservative per-core VMEM footprint for a given token tile."""
    return (2 * tm * dim * x_itemsize                 # streamed x tile, double-buffered
            + num_experts * dim * w_itemsize + 512    # resident W + bias (single-buffered)
            + 2 * tm * 128 * (x_itemsize + 4)         # (tm, 8) out blocks, lane-padded, dbl-buffered
            + 6 * num_experts * tm * 4                # f32/int32 working set (score/work/iota/...)
            + (2 << 20))                              # slack


def _choose_tm(num_tokens, dim, num_experts, x_itemsize, w_itemsize, budget,
               token_cap=4096):
    """Largest multiple-of-8 token tile fitting the VMEM budget, with >=2 grid steps."""
    t8 = _round_up(num_tokens, 8)
    tm = max(8, min(token_cap, t8) - (min(token_cap, t8) % 8))
    while tm > 8 and _vmem_estimate(tm, dim, num_experts, x_itemsize, w_itemsize) > budget:
        tm -= 8
    # Guarantee >= 2 grid steps when possible so the "parallel" token axis can
    # shard across both v7x TensorCores.
    if tm >= t8 and t8 >= 16:
        tm = max(8, (t8 // 2) - ((t8 // 2) % 8))
    # Prefer an equal-or-smaller tile that divides the (8-padded) token count,
    # to avoid a padding copy of x; accept up to 4x more grid steps for it.
    cand = tm
    while cand > 8 and t8 % cand != 0:
        cand -= 8
    if cand * 4 >= tm:
        tm = cand
    return tm


# --------------------------------------------------------------------------- #
# pallas_call wrapper
# --------------------------------------------------------------------------- #
def _gate_pallas_call(x_in, weights, bias_2d, *, tm, vmem_limit, single_buffer_resident):
    t_pad, dim = x_in.shape
    num_experts = weights.shape[0]
    k_sel = SELECT_EXPERT

    def resident_spec(shape):
        # Constant index_map -> single buffering saves a full resident copy of W.
        if single_buffer_resident and hasattr(pl, "Buffered"):
            try:
                return pl.BlockSpec(shape, lambda i: (0, 0), pipeline_mode=pl.Buffered(1))
            except TypeError:
                pass
        return pl.BlockSpec(shape, lambda i: (0, 0))

    return pl.pallas_call(
        gate_kernel,
        out_shape=(
            jax.ShapeDtypeStruct((t_pad, k_sel), x_in.dtype),
            jax.ShapeDtypeStruct((t_pad, k_sel), jnp.int32),
        ),
        grid=(t_pad // tm,),
        in_specs=[
            pl.BlockSpec((tm, dim), lambda i: (i, 0)),   # x token tile (streamed)
            resident_spec((num_experts, dim)),            # weights (resident, no transpose)
            resident_spec((num_experts, 1)),              # bias (resident)
        ],
        out_specs=(
            pl.BlockSpec((tm, k_sel), lambda i: (i, 0)),  # (tokens, 8) directly
            pl.BlockSpec((tm, k_sel), lambda i: (i, 0)),
        ),
        compiler_params=pltpu.CompilerParams(
            dimension_semantics=("parallel",),
            vmem_limit_bytes=vmem_limit,
        ),
    )(x_in, weights, bias_2d)


def gate_forward(x, weights, bias, *, tm=None):
    """x: (T, D), weights: (E, D), bias: (E,). Returns ((T, 8) x.dtype, (T, 8) int32)."""
    T, D = x.shape
    E = weights.shape[0]
    K = SELECT_EXPERT
    if E < K:
        raise ValueError(f"num_experts={E} must be >= select_expert={K}")

    capacity = _vmem_capacity_bytes()
    if tm is None:
        tm = _choose_tm(T, D, E, x.dtype.itemsize, weights.dtype.itemsize,
                        budget=int(0.70 * capacity))
    if tm != T and tm % 8 != 0:
        raise ValueError("token tile must be a multiple of 8 (or the full token count)")

    # Pad the token axis up to a multiple of the tile (only when needed); the
    # padded rows produce garbage router outputs that are sliced off below.
    t_pad = _round_up(T, tm)
    x_in = x if t_pad == T else jnp.pad(x, ((0, t_pad - T), (0, 0)))

    bias_2d = jnp.asarray(bias).reshape(E, 1)  # broadcasts over token lanes in-kernel

    vmem_limit = int(min(
        capacity,
        max(_vmem_estimate(tm, D, E, x.dtype.itemsize, weights.dtype.itemsize) + (4 << 20),
            32 << 20)))

    try:
        w_out, idx_out = _gate_pallas_call(
            x_in, weights, bias_2d, tm=tm, vmem_limit=vmem_limit,
            single_buffer_resident=True)
    except Exception:
        # Fallback for JAX versions where pl.Buffered(1) on a constant-index
        # resident block does not lower; costs one extra resident copy of W.
        w_out, idx_out = _gate_pallas_call(
            x_in, weights, bias_2d, tm=tm, vmem_limit=vmem_limit,
            single_buffer_resident=False)

    if t_pad != T:
        w_out, idx_out = w_out[:T], idx_out[:T]
    return w_out, idx_out


# --------------------------------------------------------------------------- #
# Pure-JAX reference + checks
# --------------------------------------------------------------------------- #
def gate_reference(x, weights, bias):
    score = x.astype(jnp.float32) @ weights.astype(jnp.float32).T
    score = jax.nn.softmax(score, axis=-1)
    score = score + bias.astype(jnp.float32)
    vals, idx = lax.top_k(score, SELECT_EXPERT)
    return (vals * ROUTE_SCALE).astype(x.dtype), idx.astype(jnp.int32)


def _check(x, weights, bias, tm=None):
    w_out, idx_out = gate_forward(x, weights, bias, tm=tm)
    jax.block_until_ready((w_out, idx_out))
    w_ref, idx_ref = gate_reference(x, weights, bias)
    np.testing.assert_allclose(np.asarray(w_out), np.asarray(w_ref),
                               rtol=1e-4, atol=1e-5)
    np.testing.assert_array_equal(np.asarray(idx_out), np.asarray(idx_ref))


if __name__ == "__main__":
    key = jax.random.PRNGKey(0)
    num_experts = 16

    # Case 1: small shapes consistent with the module (dim=32, 16 experts, 16 tokens).
    kx, kw, kb, key = jax.random.split(key, 4)
    x = jax.random.normal(kx, (16, 32), dtype=jnp.float32)
    weights = jax.random.normal(kw, (num_experts, 32), dtype=jnp.float32)   # torch.randn(E, D)
    bias = jax.random.normal(kb, (num_experts,), dtype=jnp.float32)         # torch.randn(E)
    _check(x, weights, bias)

    # Case 2: multi-tile grid with the auto-chosen tile (>= 2 grid steps).
    kx2, kw2, kb2, key = jax.random.split(key, 4)
    x2 = jax.random.normal(kx2, (512, 64), dtype=jnp.float32)
    w2 = jax.random.normal(kw2, (num_experts, 64), dtype=jnp.float32)
    b2 = jax.random.normal(kb2, (num_experts,), dtype=jnp.float32)
    _check(x2, w2, b2)

    # Case 3: token count with no nice divisor (exercises the pad + slice path).
    kx3, kw3, kb3, key = jax.random.split(key, 4)
    x3 = jax.random.normal(kx3, (100, 32), dtype=jnp.float32)
    w3 = jax.random.normal(kw3, (num_experts, 32), dtype=jnp.float32)
    b3 = jax.random.normal(kb3, (num_experts,), dtype=jnp.float32)
    _check(x3, w3, b3)

    # Case 4: bf16 activations/weights (halves the dominant HBM stream; the
    # kernel keeps f32 MXU accumulation and f32 softmax/top-k).
    x4 = x2.astype(jnp.bfloat16)
    w4 = w2.astype(jnp.bfloat16)
    w_out4, idx_out4 = gate_forward(x4, w4, b2)
    jax.block_until_ready((w_out4, idx_out4))
    w_ref4, _ = gate_reference(x4, w4, b2)
    np.testing.assert_allclose(np.asarray(w_out4.astype(jnp.float32)),
                               np.asarray(w_ref4.astype(jnp.float32)),
                               rtol=5e-2, atol=2e-2)
    assert w_out4.dtype == jnp.bfloat16
    assert idx_out4.shape == (512, SELECT_EXPERT) and idx_out4.dtype == jnp.int32

    print("KERNEL_OK")
</pallas_src>

<mosaic_0001>
module attributes {stable_mosaic.version = 11 : i64} {
  func.func @gate_kernel(%arg0: i32, %arg1: memref<8x32xf32, #tpu.memory_space<vmem>>, %arg2: memref<16x32xf32, #tpu.memory_space<vmem>>, %arg3: memref<16x1xf32, #tpu.memory_space<vmem>>, %arg4: memref<8x8xf32, #tpu.memory_space<vmem>>, %arg5: memref<8x8xi32, #tpu.memory_space<vmem>>) attributes {dimension_semantics = [#tpu.dimension_semantics<parallel>], iteration_bounds = array<i64: 2>, scalar_prefetch = 0 : i64, scratch_operands = 0 : i64, tpu.core_type = #tpu.core_type<tc>, window_params = [{transform_indices = @transform_0, window_bounds = array<i64: 8, 32>}, {pipeline_mode = #tpu.pipeline_mode<synchronous>, transform_indices = @transform_1, window_bounds = array<i64: 16, 32>}, {pipeline_mode = #tpu.pipeline_mode<synchronous>, transform_indices = @transform_2, window_bounds = array<i64: 16, 1>}, {transform_indices = @transform_3, window_bounds = array<i64: 8, 8>}, {transform_indices = @transform_4, window_bounds = array<i64: 8, 8>}]} {
    %c0 = arith.constant 0 : index
    %c0_0 = arith.constant 0 : index
    %0 = vector.load %arg2[%c0, %c0_0] : memref<16x32xf32, #tpu.memory_space<vmem>>, vector<16x32xf32>
    %c0_1 = arith.constant 0 : index
    %c0_2 = arith.constant 0 : index
    %1 = vector.load %arg1[%c0_1, %c0_2] : memref<8x32xf32, #tpu.memory_space<vmem>>, vector<8x32xf32>
    %cst = arith.constant dense<0.000000e+00> : vector<16x8xf32>
    %2 = tpu.matmul %0, %1, %cst {dimension_numbers = #tpu.dot_dimension_numbers<[1], [1], [0], [0], [0, 0, 1, 0], [], []>} : vector<16x32xf32>, vector<8x32xf32>, vector<16x8xf32> -> vector<16x8xf32>
    %cst_3 = arith.constant dense<0xFF800000> : vector<8xf32>
    %3 = vector.multi_reduction <maximumf>, %2, %cst_3 [0] : vector<16x8xf32> to vector<8xf32>
    %4 = vector.shape_cast %3 : vector<8xf32> to vector<1x8xf32>
    %5 = vector.broadcast %4 : vector<1x8xf32> to vector<16x8xf32>
    %6 = arith.subf %2, %5 : vector<16x8xf32>
    %7 = math.exp %6 : vector<16x8xf32>
    %cst_4 = arith.constant dense<0.000000e+00> : vector<8xf32>
    %8 = vector.multi_reduction <add>, %7, %cst_4 [0] : vector<16x8xf32> to vector<8xf32>
    %9 = vector.shape_cast %8 : vector<8xf32> to vector<1x8xf32>
    %10 = tpu.reciprocal %9 : vector<1x8xf32> -> vector<1x8xf32>
    %11 = vector.broadcast %10 : vector<1x8xf32> to vector<16x8xf32>
    %12 = arith.mulf %7, %11 : vector<16x8xf32>
    %c0_5 = arith.constant 0 : index
    %c0_6 = arith.constant 0 : index
    %13 = vector.load %arg3[%c0_5, %c0_6] : memref<16x1xf32, #tpu.memory_space<vmem>>, vector<16x1xf32>
    %14 = vector.broadcast %13 : vector<16x1xf32> to vector<16x8xf32>
    %15 = arith.addf %12, %14 : vector<16x8xf32>
    %16 = tpu.iota {dimensions = array<i32: 0>} : vector<16x8xi32>
    %cst_7 = arith.constant dense<0xFF800000> : vector<8xf32>
    %17 = vector.multi_reduction <maximumf>, %15, %cst_7 [0] : vector<16x8xf32> to vector<8xf32>
    %18 = vector.shape_cast %17 : vector<8xf32> to vector<1x8xf32>
    %19 = vector.broadcast %18 : vector<1x8xf32> to vector<16x8xf32>
    %20 = arith.cmpf oeq, %15, %19 : vector<16x8xf32>
    %c16_i32 = arith.constant 16 : i32
    %21 = vector.broadcast %c16_i32 : i32 to vector<16x8xi32>
    %22 = arith.select %20, %16, %21 : vector<16x8xi1>, vector<16x8xi32>
    %cst_8 = arith.constant dense<2147483647> : vector<8xi32>
    %23 = vector.multi_reduction <minsi>, %22, %cst_8 [0] : vector<16x8xi32> to vector<8xi32>
    %24 = vector.shape_cast %23 : vector<8xi32> to vector<1x8xi32>
    %25 = vector.broadcast %24 : vector<1x8xi32> to vector<16x8xi32>
    %26 = arith.cmpi eq, %16, %25 : vector<16x8xi32>
    %cst_9 = arith.constant 0xFF800000 : f32
    %27 = vector.broadcast %cst_9 : f32 to vector<16x8xf32>
    %28 = arith.select %26, %27, %15 : vector<16x8xi1>, vector<16x8xf32>
    %cst_10 = arith.constant dense<0xFF800000> : vector<8xf32>
    %29 = vector.multi_reduction <maximumf>, %28, %cst_10 [0] : vector<16x8xf32> to vector<8xf32>
    %30 = vector.shape_cast %29 : vector<8xf32> to vector<1x8xf32>
    %31 = vector.broadcast %30 : vector<1x8xf32> to vector<16x8xf32>
    %32 = arith.cmpf oeq, %28, %31 : vector<16x8xf32>
    %c16_i32_11 = arith.constant 16 : i32
    %33 = vector.broadcast %c16_i32_11 : i32 to vector<16x8xi32>
    %34 = arith.select %32, %16, %33 : vector<16x8xi1>, vector<16x8xi32>
    %cst_12 = arith.constant dense<2147483647> : vector<8xi32>
    %35 = vector.multi_reduction <minsi>, %34, %cst_12 [0] : vector<16x8xi32> to vector<8xi32>
    %36 = vector.shape_cast %35 : vector<8xi32> to vector<1x8xi32>
    %37 = vector.broadcast %36 : vector<1x8xi32> to vector<16x8xi32>
    %38 = arith.cmpi eq, %16, %37 : vector<16x8xi32>
    %cst_13 = arith.constant 0xFF800000 : f32
    %39 = vector.broadcast %cst_13 : f32 to vector<16x8xf32>
    %40 = arith.select %38, %39, %28 : vector<16x8xi1>, vector<16x8xf32>
    %cst_14 = arith.constant dense<0xFF800000> : vector<8xf32>
    %41 = vector.multi_reduction <maximumf>, %40, %cst_14 [0] : vector<16x8xf32> to vector<8xf32>
    %42 = vector.shape_cast %41 : vector<8xf32> to vector<1x8xf32>
    %43 = vector.broadcast %42 : vector<1x8xf32> to vector<16x8xf32>
    %44 = arith.cmpf oeq, %40, %43 : vector<16x8xf32>
    %c16_i32_15 = arith.constant 16 : i32
    %45 = vector.broadcast %c16_i32_15 : i32 to vector<16x8xi32>
    %46 = arith.select %44, %16, %45 : vector<16x8xi1>, vector<16x8xi32>
    %cst_16 = arith.constant dense<2147483647> : vector<8xi32>
    %47 = vector.multi_reduction <minsi>, %46, %cst_16 [0] : vector<16x8xi32> to vector<8xi32>
    %48 = vector.shape_cast %47 : vector<8xi32> to vector<1x8xi32>
    %49 = vector.broadcast %48 : vector<1x8xi32> to vector<16x8xi32>
    %50 = arith.cmpi eq, %16, %49 : vector<16x8xi32>
    %cst_17 = arith.constant 0xFF800000 : f32
    %51 = vector.broadcast %cst_17 : f32 to vector<16x8xf32>
    %52 = arith.select %50, %51, %40 : vector<16x8xi1>, vector<16x8xf32>
    %cst_18 = arith.constant dense<0xFF800000> : vector<8xf32>
    %53 = vector.multi_reduction <maximumf>, %52, %cst_18 [0] : vector<16x8xf32> to vector<8xf32>
    %54 = vector.shape_cast %53 : vector<8xf32> to vector<1x8xf32>
    %55 = vector.broadcast %54 : vector<1x8xf32> to vector<16x8xf32>
    %56 = arith.cmpf oeq, %52, %55 : vector<16x8xf32>
    %c16_i32_19 = arith.constant 16 : i32
    %57 = vector.broadcast %c16_i32_19 : i32 to vector<16x8xi32>
    %58 = arith.select %56, %16, %57 : vector<16x8xi1>, vector<16x8xi32>
    %cst_20 = arith.constant dense<2147483647> : vector<8xi32>
    %59 = vector.multi_reduction <minsi>, %58, %cst_20 [0] : vector<16x8xi32> to vector<8xi32>
    %60 = vector.shape_cast %59 : vector<8xi32> to vector<1x8xi32>
    %61 = vector.broadcast %60 : vector<1x8xi32> to vector<16x8xi32>
    %62 = arith.cmpi eq, %16, %61 : vector<16x8xi32>
    %cst_21 = arith.constant 0xFF800000 : f32
    %63 = vector.broadcast %cst_21 : f32 to vector<16x8xf32>
    %64 = arith.select %62, %63, %52 : vector<16x8xi1>, vector<16x8xf32>
    %cst_22 = arith.constant dense<0xFF800000> : vector<8xf32>
    %65 = vector.multi_reduction <maximumf>, %64, %cst_22 [0] : vector<16x8xf32> to vector<8xf32>
    %66 = vector.shape_cast %65 : vector<8xf32> to vector<1x8xf32>
    %67 = vector.broadcast %66 : vector<1x8xf32> to vector<16x8xf32>
    %68 = arith.cmpf oeq, %64, %67 : vector<16x8xf32>
    %c16_i32_23 = arith.constant 16 : i32
    %69 = vector.broadcast %c16_i32_23 : i32 to vector<16x8xi32>
    %70 = arith.select %68, %16, %69 : vector<16x8xi1>, vector<16x8xi32>
    %cst_24 = arith.constant dense<2147483647> : vector<8xi32>
    %71 = vector.multi_reduction <minsi>, %70, %cst_24 [0] : vector<16x8xi32> to vector<8xi32>
    %72 = vector.shape_cast %71 : vector<8xi32> to vector<1x8xi32>
    %73 = vector.broadcast %72 : vector<1x8xi32> to vector<16x8xi32>
    %74 = arith.cmpi eq, %16, %73 : vector<16x8xi32>
    %cst_25 = arith.constant 0xFF800000 : f32
    %75 = vector.broadcast %cst_25 : f32 to vector<16x8xf32>
    %76 = arith.select %74, %75, %64 : vector<16x8xi1>, vector<16x8xf32>
    %cst_26 = arith.constant dense<0xFF800000> : vector<8xf32>
    %77 = vector.multi_reduction <maximumf>, %76, %cst_26 [0] : vector<16x8xf32> to vector<8xf32>
    %78 = vector.shape_cast %77 : vector<8xf32> to vector<1x8xf32>
    %79 = vector.broadcast %78 : vector<1x8xf32> to vector<16x8xf32>
    %80 = arith.cmpf oeq, %76, %79 : vector<16x8xf32>
    %c16_i32_27 = arith.constant 16 : i32
    %81 = vector.broadcast %c16_i32_27 : i32 to vector<16x8xi32>
    %82 = arith.select %80, %16, %81 : vector<16x8xi1>, vector<16x8xi32>
    %cst_28 = arith.constant dense<2147483647> : vector<8xi32>
    %83 = vector.multi_reduction <minsi>, %82, %cst_28 [0] : vector<16x8xi32> to vector<8xi32>
    %84 = vector.shape_cast %83 : vector<8xi32> to vector<1x8xi32>
    %85 = vector.broadcast %84 : vector<1x8xi32> to vector<16x8xi32>
    %86 = arith.cmpi eq, %16, %85 : vector<16x8xi32>
    %cst_29 = arith.constant 0xFF800000 : f32
    %87 = vector.broadcast %cst_29 : f32 to vector<16x8xf32>
    %88 = arith.select %86, %87, %76 : vector<16x8xi1>, vector<16x8xf32>
    %cst_30 = arith.constant dense<0xFF800000> : vector<8xf32>
    %89 = vector.multi_reduction <maximumf>, %88, %cst_30 [0] : vector<16x8xf32> to vector<8xf32>
    %90 = vector.shape_cast %89 : vector<8xf32> to vector<1x8xf32>
    %91 = vector.broadcast %90 : vector<1x8xf32> to vector<16x8xf32>
    %92 = arith.cmpf oeq, %88, %91 : vector<16x8xf32>
    %c16_i32_31 = arith.constant 16 : i32
    %93 = vector.broadcast %c16_i32_31 : i32 to vector<16x8xi32>
    %94 = arith.select %92, %16, %93 : vector<16x8xi1>, vector<16x8xi32>
    %cst_32 = arith.constant dense<2147483647> : vector<8xi32>
    %95 = vector.multi_reduction <minsi>, %94, %cst_32 [0] : vector<16x8xi32> to vector<8xi32>
    %96 = vector.shape_cast %95 : vector<8xi32> to vector<1x8xi32>
    %97 = vector.broadcast %96 : vector<1x8xi32> to vector<16x8xi32>
    %98 = arith.cmpi eq, %16, %97 : vector<16x8xi32>
    %cst_33 = arith.constant 0xFF800000 : f32
    %99 = vector.broadcast %cst_33 : f32 to vector<16x8xf32>
    %100 = arith.select %98, %99, %88 : vector<16x8xi1>, vector<16x8xf32>
    %cst_34 = arith.constant dense<0xFF800000> : vector<8xf32>
    %101 = vector.multi_reduction <maximumf>, %100, %cst_34 [0] : vector<16x8xf32> to vector<8xf32>
    %102 = vector.shape_cast %101 : vector<8xf32> to vector<1x8xf32>
    %103 = vector.broadcast %102 : vector<1x8xf32> to vector<16x8xf32>
    %104 = arith.cmpf oeq, %100, %103 : vector<16x8xf32>
    %c16_i32_35 = arith.constant 16 : i32
    %105 = vector.broadcast %c16_i32_35 : i32 to vector<16x8xi32>
    %106 = arith.select %104, %16, %105 : vector<16x8xi1>, vector<16x8xi32>
    %cst_36 = arith.constant dense<2147483647> : vector<8xi32>
    %107 = vector.multi_reduction <minsi>, %106, %cst_36 [0] : vector<16x8xi32> to vector<8xi32>
    %108 = vector.shape_cast %107 : vector<8xi32> to vector<1x8xi32>
    %109 = tpu.concatenate %18, %30, %42, %54, %66, %78, %90, %102 in 0 : vector<1x8xf32>, vector<1x8xf32>, vector<1x8xf32>, vector<1x8xf32>, vector<1x8xf32>, vector<1x8xf32>, vector<1x8xf32>, vector<1x8xf32> -> vector<8x8xf32>
    %110 = tpu.concatenate %24, %36, %48, %60, %72, %84, %96, %108 in 0 : vector<1x8xi32>, vector<1x8xi32>, vector<1x8xi32>, vector<1x8xi32>, vector<1x8xi32>, vector<1x8xi32>, vector<1x8xi32>, vector<1x8xi32> -> vector<8x8xi32>
    %111 = tpu.transpose %109, [1, 0] : vector<8x8xf32> -> vector<8x8xf32>
    %c0_37 = arith.constant 0 : index
    %c0_38 = arith.constant 0 : index
    %112 = vector.load %arg4[%c0_37, %c0_38] : memref<8x8xf32, #tpu.memory_space<vmem>>, vector<8x8xf32>
    tpu.vector_store %arg4[%c0_37, %c0_38], %111 {strides = array<i32>} : memref<8x8xf32, #tpu.memory_space<vmem>>, vector<8x8xf32>,
    %113 = tpu.transpose %110, [1, 0] : vector<8x8xi32> -> vector<8x8xi32>
    %c0_39 = arith.constant 0 : index
    %c0_40 = arith.constant 0 : index
    %114 = vector.load %arg5[%c0_39, %c0_40] : memref<8x8xi32, #tpu.memory_space<vmem>>, vector<8x8xi32>
    tpu.vector_store %arg5[%c0_39, %c0_40], %113 {strides = array<i32>} : memref<8x8xi32, #tpu.memory_space<vmem>>, vector<8x8xi32>,
    return
  }
  func.func @transform_0(%arg0: i32) -> (i32, i32) {
    %c0_i32 = arith.constant 0 : i32
    %c0_i32_0 = arith.constant 0 : i32
    return %arg0, %c0_i32 : i32, i32
  }
  func.func @transform_1(%arg0: i32) -> (i32, i32) {
    %c0_i32 = arith.constant 0 : i32
    %c0_i32_0 = arith.constant 0 : i32
    %c0_i32_1 = arith.constant 0 : i32
    return %c0_i32, %c0_i32_0 : i32, i32
  }
  func.func @transform_2(%arg0: i32) -> (i32, i32) {
    %c0_i32 = arith.constant 0 : i32
    %c0_i32_0 = arith.constant 0 : i32
    %c0_i32_1 = arith.constant 0 : i32
    return %c0_i32, %c0_i32_0 : i32, i32
  }
  func.func @transform_3(%arg0: i32) -> (i32, i32) {
    %c0_i32 = arith.constant 0 : i32
    %c0_i32_0 = arith.constant 0 : i32
    return %arg0, %c0_i32 : i32, i32
  }
  func.func @transform_4(%arg0: i32) -> (i32, i32) {
    %c0_i32 = arith.constant 0 : i32
    %c0_i32_0 = arith.constant 0 : i32
    return %arg0, %c0_i32 : i32, i32
  }
}

module attributes {stable_mosaic.version = 11 : i64} {
  func.func @gate_kernel(%arg0: i32, %arg1: memref<8x32xf32, #tpu.memory_space<vmem>>, %arg2: memref<16x32xf32, #tpu.memory_space<vmem>>, %arg3: memref<16x1xf32, #tpu.memory_space<vmem>>, %arg4: memref<8x8xf32, #tpu.memory_space<vmem>>, %arg5: memref<8x8xi32, #tpu.memory_space<vmem>>) attributes {dimension_semantics = [#tpu.dimension_semantics<parallel>], iteration_bounds = array<i64: 2>, scalar_prefetch = 0 : i64, scratch_operands = 0 : i64, tpu.core_type = #tpu.core_type<tc>, window_params = [{transform_indices = @transform_0, window_bounds = array<i64: 8, 32>}, {pipeline_mode = #tpu.pipeline_mode<synchronous>, transform_indices = @transform_1, window_bounds = array<i64: 16, 32>}, {pipeline_mode = #tpu.pipeline_mode<synchronous>, transform_indices = @transform_2, window_bounds = array<i64: 16, 1>}, {transform_indices = @transform_3, window_bounds = array<i64: 8, 8>}, {transform_indices = @transform_4, window_bounds = array<i64: 8, 8>}]} {
    %c0 = arith.constant 0 : index
    %c0_0 = arith.constant 0 : index
    %0 = vector.load %arg2[%c0, %c0_0] : memref<16x32xf32, #tpu.memory_space<vmem>>, vector<16x32xf32>
    %c0_1 = arith.constant 0 : index
    %c0_2 = arith.constant 0 : index
    %1 = vector.load %arg1[%c0_1, %c0_2] : memref<8x32xf32, #tpu.memory_space<vmem>>, vector<8x32xf32>
    %cst = arith.constant dense<0.000000e+00> : vector<16x8xf32>
    %2 = tpu.matmul %0, %1, %cst {dimension_numbers = #tpu.dot_dimension_numbers<[1], [1], [0], [0], [0, 0, 1, 0], [], []>} : vector<16x32xf32>, vector<8x32xf32>, vector<16x8xf32> -> vector<16x8xf32>
    %cst_3 = arith.constant dense<0xFF800000> : vector<8xf32>
    %3 = vector.multi_reduction <maximumf>, %2, %cst_3 [0] : vector<16x8xf32> to vector<8xf32>
    %4 = vector.shape_cast %3 : vector<8xf32> to vector<1x8xf32>
    %5 = vector.broadcast %4 : vector<1x8xf32> to vector<16x8xf32>
    %6 = arith.subf %2, %5 : vector<16x8xf32>
    %7 = math.exp %6 : vector<16x8xf32>
    %cst_4 = arith.constant dense<0.000000e+00> : vector<8xf32>
    %8 = vector.multi_reduction <add>, %7, %cst_4 [0] : vector<16x8xf32> to vector<8xf32>
    %9 = vector.shape_cast %8 : vector<8xf32> to vector<1x8xf32>
    %10 = tpu.reciprocal %9 : vector<1x8xf32> -> vector<1x8xf32>
    %11 = vector.broadcast %10 : vector<1x8xf32> to vector<16x8xf32>
    %12 = arith.mulf %7, %11 : vector<16x8xf32>
    %c0_5 = arith.constant 0 : index
    %c0_6 = arith.constant 0 : index
    %13 = vector.load %arg3[%c0_5, %c0_6] : memref<16x1xf32, #tpu.memory_space<vmem>>, vector<16x1xf32>
    %14 = vector.broadcast %13 : vector<16x1xf32> to vector<16x8xf32>
    %15 = arith.addf %12, %14 : vector<16x8xf32>
    %16 = tpu.iota {dimensions = array<i32: 0>} : vector<16x8xi32>
    %cst_7 = arith.constant dense<0xFF800000> : vector<8xf32>
    %17 = vector.multi_reduction <maximumf>, %15, %cst_7 [0] : vector<16x8xf32> to vector<8xf32>
    %18 = vector.shape_cast %17 : vector<8xf32> to vector<1x8xf32>
    %19 = vector.broadcast %18 : vector<1x8xf32> to vector<16x8xf32>
    %20 = arith.cmpf oeq, %15, %19 : vector<16x8xf32>
    %c16_i32 = arith.constant 16 : i32
    %21 = vector.broadcast %c16_i32 : i32 to vector<16x8xi32>
    %22 = arith.select %20, %16, %21 : vector<16x8xi1>, vector<16x8xi32>
    %cst_8 = arith.constant dense<2147483647> : vector<8xi32>
    %23 = vector.multi_reduction <minsi>, %22, %cst_8 [0] : vector<16x8xi32> to vector<8xi32>
    %24 = vector.shape_cast %23 : vector<8xi32> to vector<1x8xi32>
    %25 = vector.broadcast %24 : vector<1x8xi32> to vector<16x8xi32>
    %26 = arith.cmpi eq, %16, %25 : vector<16x8xi32>
    %cst_9 = arith.constant 0xFF800000 : f32
    %27 = vector.broadcast %cst_9 : f32 to vector<16x8xf32>
    %28 = arith.select %26, %27, %15 : vector<16x8xi1>, vector<16x8xf32>
    %cst_10 = arith.constant dense<0xFF800000> : vector<8xf32>
    %29 = vector.multi_reduction <maximumf>, %28, %cst_10 [0] : vector<16x8xf32> to vector<8xf32>
    %30 = vector.shape_cast %29 : vector<8xf32> to vector<1x8xf32>
    %31 = vector.broadcast %30 : vector<1x8xf32> to vector<16x8xf32>
    %32 = arith.cmpf oeq, %28, %31 : vector<16x8xf32>
    %c16_i32_11 = arith.constant 16 : i32
    %33 = vector.broadcast %c16_i32_11 : i32 to vector<16x8xi32>
    %34 = arith.select %32, %16, %33 : vector<16x8xi1>, vector<16x8xi32>
    %cst_12 = arith.constant dense<2147483647> : vector<8xi32>
    %35 = vector.multi_reduction <minsi>, %34, %cst_12 [0] : vector<16x8xi32> to vector<8xi32>
    %36 = vector.shape_cast %35 : vector<8xi32> to vector<1x8xi32>
    %37 = vector.broadcast %36 : vector<1x8xi32> to vector<16x8xi32>
    %38 = arith.cmpi eq, %16, %37 : vector<16x8xi32>
    %cst_13 = arith.constant 0xFF800000 : f32
    %39 = vector.broadcast %cst_13 : f32 to vector<16x8xf32>
    %40 = arith.select %38, %39, %28 : vector<16x8xi1>, vector<16x8xf32>
    %cst_14 = arith.constant dense<0xFF800000> : vector<8xf32>
    %41 = vector.multi_reduction <maximumf>, %40, %cst_14 [0] : vector<16x8xf32> to vector<8xf32>
    %42 = vector.shape_cast %41 : vector<8xf32> to vector<1x8xf32>
    %43 = vector.broadcast %42 : vector<1x8xf32> to vector<16x8xf32>
    %44 = arith.cmpf oeq, %40, %43 : vector<16x8xf32>
    %c16_i32_15 = arith.constant 16 : i32
    %45 = vector.broadcast %c16_i32_15 : i32 to vector<16x8xi32>
    %46 = arith.select %44, %16, %45 : vector<16x8xi1>, vector<16x8xi32>
    %cst_16 = arith.constant dense<2147483647> : vector<8xi32>
    %47 = vector.multi_reduction <minsi>, %46, %cst_16 [0] : vector<16x8xi32> to vector<8xi32>
    %48 = vector.shape_cast %47 : vector<8xi32> to vector<1x8xi32>
    %49 = vector.broadcast %48 : vector<1x8xi32> to vector<16x8xi32>
    %50 = arith.cmpi eq, %16, %49 : vector<16x8xi32>
    %cst_17 = arith.constant 0xFF800000 : f32
    %51 = vector.broadcast %cst_17 : f32 to vector<16x8xf32>
    %52 = arith.select %50, %51, %40 : vector<16x8xi1>, vector<16x8xf32>
    %cst_18 = arith.constant dense<0xFF800000> : vector<8xf32>
    %53 = vector.multi_reduction <maximumf>, %52, %cst_18 [0] : vector<16x8xf32> to vector<8xf32>
    %54 = vector.shape_cast %53 : vector<8xf32> to vector<1x8xf32>
    %55 = vector.broadcast %54 : vector<1x8xf32> to vector<16x8xf32>
    %56 = arith.cmpf oeq, %52, %55 : vector<16x8xf32>
    %c16_i32_19 = arith.constant 16 : i32
    %57 = vector.broadcast %c16_i32_19 : i32 to vector<16x8xi32>
    %58 = arith.select %56, %16, %57 : vector<16x8xi1>, vector<16x8xi32>
    %cst_20 = arith.constant dense<2147483647> : vector<8xi32>
    %59 = vector.multi_reduction <minsi>, %58, %cst_20 [0] : vector<16x8xi32> to vector<8xi32>
    %60 = vector.shape_cast %59 : vector<8xi32> to vector<1x8xi32>
    %61 = vector.broadcast %60 : vector<1x8xi32> to vector<16x8xi32>
    %62 = arith.cmpi eq, %16, %61 : vector<16x8xi32>
    %cst_21 = arith.constant 0xFF800000 : f32
    %63 = vector.broadcast %cst_21 : f32 to vector<16x8xf32>
    %64 = arith.select %62, %63, %52 : vector<16x8xi1>, vector<16x8xf32>
    %cst_22 = arith.constant dense<0xFF800000> : vector<8xf32>
    %65 = vector.multi_reduction <maximumf>, %64, %cst_22 [0] : vector<16x8xf32> to vector<8xf32>
    %66 = vector.shape_cast %65 : vector<8xf32> to vector<1x8xf32>
    %67 = vector.broadcast %66 : vector<1x8xf32> to vector<16x8xf32>
    %68 = arith.cmpf oeq, %64, %67 : vector<16x8xf32>
    %c16_i32_23 = arith.constant 16 : i32
    %69 = vector.broadcast %c16_i32_23 : i32 to vector<16x8xi32>
    %70 = arith.select %68, %16, %69 : vector<16x8xi1>, vector<16x8xi32>
    %cst_24 = arith.constant dense<2147483647> : vector<8xi32>
    %71 = vector.multi_reduction <minsi>, %70, %cst_24 [0] : vector<16x8xi32> to vector<8xi32>
    %72 = vector.shape_cast %71 : vector<8xi32> to vector<1x8xi32>
    %73 = vector.broadcast %72 : vector<1x8xi32> to vector<16x8xi32>
    %74 = arith.cmpi eq, %16, %73 : vector<16x8xi32>
    %cst_25 = arith.constant 0xFF800000 : f32
    %75 = vector.broadcast %cst_25 : f32 to vector<16x8xf32>
    %76 = arith.select %74, %75, %64 : vector<16x8xi1>, vector<16x8xf32>
    %cst_26 = arith.constant dense<0xFF800000> : vector<8xf32>
    %77 = vector.multi_reduction <maximumf>, %76, %cst_26 [0] : vector<16x8xf32> to vector<8xf32>
    %78 = vector.shape_cast %77 : vector<8xf32> to vector<1x8xf32>
    %79 = vector.broadcast %78 : vector<1x8xf32> to vector<16x8xf32>
    %80 = arith.cmpf oeq, %76, %79 : vector<16x8xf32>
    %c16_i32_27 = arith.constant 16 : i32
    %81 = vector.broadcast %c16_i32_27 : i32 to vector<16x8xi32>
    %82 = arith.select %80, %16, %81 : vector<16x8xi1>, vector<16x8xi32>
    %cst_28 = arith.constant dense<2147483647> : vector<8xi32>
    %83 = vector.multi_reduction <minsi>, %82, %cst_28 [0] : vector<16x8xi32> to vector<8xi32>
    %84 = vector.shape_cast %83 : vector<8xi32> to vector<1x8xi32>
    %85 = vector.broadcast %84 : vector<1x8xi32> to vector<16x8xi32>
    %86 = arith.cmpi eq, %16, %85 : vector<16x8xi32>
    %cst_29 = arith.constant 0xFF800000 : f32
    %87 = vector.broadcast %cst_29 : f32 to vector<16x8xf32>
    %88 = arith.select %86, %87, %76 : vector<16x8xi1>, vector<16x8xf32>
    %cst_30 = arith.constant dense<0xFF800000> : vector<8xf32>
    %89 = vector.multi_reduction <maximumf>, %88, %cst_30 [0] : vector<16x8xf32> to vector<8xf32>
    %90 = vector.shape_cast %89 : vector<8xf32> to vector<1x8xf32>
    %91 = vector.broadcast %90 : vector<1x8xf32> to vector<16x8xf32>
    %92 = arith.cmpf oeq, %88, %91 : vector<16x8xf32>
    %c16_i32_31 = arith.constant 16 : i32
    %93 = vector.broadcast %c16_i32_31 : i32 to vector<16x8xi32>
    %94 = arith.select %92, %16, %93 : vector<16x8xi1>, vector<16x8xi32>
    %cst_32 = arith.constant dense<2147483647> : vector<8xi32>
    %95 = vector.multi_reduction <minsi>, %94, %cst_32 [0] : vector<16x8xi32> to vector<8xi32>
    %96 = vector.shape_cast %95 : vector<8xi32> to vector<1x8xi32>
    %97 = vector.broadcast %96 : vector<1x8xi32> to vector<16x8xi32>
    %98 = arith.cmpi eq, %16, %97 : vector<16x8xi32>
    %cst_33 = arith.constant 0xFF800000 : f32
    %99 = vector.broadcast %cst_33 : f32 to vector<16x8xf32>
    %100 = arith.select %98, %99, %88 : vector<16x8xi1>, vector<16x8xf32>
    %cst_34 = arith.constant dense<0xFF800000> : vector<8xf32>
    %101 = vector.multi_reduction <maximumf>, %100, %cst_34 [0] : vector<16x8xf32> to vector<8xf32>
    %102 = vector.shape_cast %101 : vector<8xf32> to vector<1x8xf32>
    %103 = vector.broadcast %102 : vector<1x8xf32> to vector<16x8xf32>
    %104 = arith.cmpf oeq, %100, %103 : vector<16x8xf32>
    %c16_i32_35 = arith.constant 16 : i32
    %105 = vector.broadcast %c16_i32_35 : i32 to vector<16x8xi32>
    %106 = arith.select %104, %16, %105 : vector<16x8xi1>, vector<16x8xi32>
    %cst_36 = arith.constant dense<2147483647> : vector<8xi32>
    %107 = vector.multi_reduction <minsi>, %106, %cst_36 [0] : vector<16x8xi32> to vector<8xi32>
    %108 = vector.shape_cast %107 : vector<8xi32> to vector<1x8xi32>
    %109 = tpu.concatenate %18, %30, %42, %54, %66, %78, %90, %102 in 0 : vector<1x8xf32>, vector<1x8xf32>, vector<1x8xf32>, vector<1x8xf32>, vector<1x8xf32>, vector<1x8xf32>, vector<1x8xf32>, vector<1x8xf32> -> vector<8x8xf32>
    %110 = tpu.concatenate %24, %36, %48, %60, %72, %84, %96, %108 in 0 : vector<1x8xi32>, vector<1x8xi32>, vector<1x8xi32>, vector<1x8xi32>, vector<1x8xi32>, vector<1x8xi32>, vector<1x8xi32>, vector<1x8xi32> -> vector<8x8xi32>
    %111 = tpu.transpose %109, [1, 0] : vector<8x8xf32> -> vector<8x8xf32>
    %c0_37 = arith.constant 0 : index
    %c0_38 = arith.constant 0 : index
    %112 = vector.load %arg4[%c0_37, %c0_38] : memref<8x8xf32, #tpu.memory_space<vmem>>, vector<8x8xf32>
    tpu.vector_store %arg4[%c0_37, %c0_38], %111 {strides = array<i32>} : memref<8x8xf32, #tpu.memory_space<vmem>>, vector<8x8xf32>,
    %113 = tpu.transpose %110, [1, 0] : vector<8x8xi32> -> vector<8x8xi32>
    %c0_39 = arith.constant 0 : index
    %c0_40 = arith.constant 0 : index
    %114 = vector.load %arg5[%c0_39, %c0_40] : memref<8x8xi32, #tpu.memory_space<vmem>>, vector<8x8xi32>
    tpu.vector_store %arg5[%c0_39, %c0_40], %113 {strides = array<i32>} : memref<8x8xi32, #tpu.memory_space<vmem>>, vector<8x8xi32>,
    return
  }
  func.func @transform_0(%arg0: i32) -> (i32, i32) {
    %c0_i32 = arith.constant 0 : i32
    %c0_i32_0 = arith.constant 0 : i32
    return %arg0, %c0_i32 : i32, i32
  }
  func.func @transform_1(%arg0: i32) -> (i32, i32) {
    %c0_i32 = arith.constant 0 : i32
    %c0_i32_0 = arith.constant 0 : i32
    %c0_i32_1 = arith.constant 0 : i32
    return %c0_i32, %c0_i32_0 : i32, i32
  }
  func.func @transform_2(%arg0: i32) -> (i32, i32) {
    %c0_i32 = arith.constant 0 : i32
    %c0_i32_0 = arith.constant 0 : i32
    %c0_i32_1 = arith.constant 0 : i32
    return %c0_i32, %c0_i32_0 : i32, i32
  }
  func.func @transform_3(%arg0: i32) -> (i32, i32) {
    %c0_i32 = arith.constant 0 : i32
    %c0_i32_0 = arith.constant 0 : i32
    return %arg0, %c0_i32 : i32, i32
  }
  func.func @transform_4(%arg0: i32) -> (i32, i32) {
    %c0_i32 = arith.constant 0 : i32
    %c0_i32_0 = arith.constant 0 : i32
    return %arg0, %c0_i32 : i32, i32
  }
}

</mosaic_0001>

<llo_original>
// kernel: tpu_custom_call.1
$region0: #{tpu_custom_call.1}
  #allocation0 [shape = 'u32[]', space=smem, size = 0x4, offset = 0x4, fixed_abs, tag = 'smem constant byte address 0x4 - core index']
  #allocation1 [shape = 'u32[144,128]{1,0:T(1,128)}', space=vmem, size = 0x12000, scoped, tag = 'internal scratch']
  %s0 = inlined_call_operand.vmem [shape: f32[16,32], index: 0, kind: input, shape index: {}]
  %s1 = inlined_call_operand.hbm [shape: f32[16,32], index: 1, kind: input, shape index: {}]
  %s2 = inlined_call_operand.vmem [shape: f32[16,1], index: 2, kind: input, shape index: {}]
  %s3 = inlined_call_operand.vmem [shape: f32[16,8], index: 3, kind: output, shape index: {0}]
  %s4 = inlined_call_operand.vmem [shape: s32[16,8], index: 4, kind: output, shape index: {1}]
  %5 = xla_tuple %s3, %s4
  %s6 = sld [smem:[#allocation0]]
  $region57: #{tpu_custom_call.1} parent=0
    _
  %s8 = ssub.s32 1, %s6
  %s9 = scalar_select 0, %s8, %s6
  $region1: #{tpu_custom_call.1} parent=0
    #allocation2 [shape = 'u8[8192]{0}', space=vmem, size = 0x2000, scoped, tag = 'input window, operand 1, single buffered']
    #allocation3 [shape = 's32[2]{0}', space=sflag, size = 0x8, scoped, tag = 'scoped memory for tpu_custom_call.1']
    %10 = vsyncpa [#allocation3], 0
    loop: start=0, step=1, limit=4
    $region2: #{tpu_custom_call.1} parent=1 // loop_pre_header
      _
    $region3: #{tpu_custom_call.1} parent=1 // loop_header
      %s12 = sphi 0, %s16
      %p13 = scmp.ge.s32.totalorder %s12, 4
      %s22 = sphi 0, %s24
      %s25 = sphi 0, %s22
      %s26 = sphi 0, %s25
      %s42 = sphi 0, %s26
      %s46 = sphi 0, %s46
      %s48 = sphi 0, %s46
      %s49 = sphi 0, %s48
      %s63 = sphi 0, %s49
      %s67 = sphi 0, %s67
      %s69 = sphi 0, %s67
      %s70 = sphi 0, %s69
      %s84 = sphi 0, %s70
      %s90 = sphi 0, %s92
      %s93 = sphi 0, %s90
      %s94 = sphi 0, %s93
      %s110 = sphi 0, %s94
      %s116 = sphi 0, %s118
      %s119 = sphi 0, %s116
      %s120 = sphi 0, %s119
      %s136 = sphi 0, %s120
    $region4: #{tpu_custom_call.1} parent=1 // loop_header_branch
      %15 = sbr.rel (%p13) target = $region8
    $region5: #{tpu_custom_call.1} parent=1 // loop_body
      %s17 = ssub.s32 %s12, 1
      %s18 = ssub.s32 %s12, 2
      %s19 = sadd.s32 %s12, 1
      %s20 = ssub.s32 %s12, %s19
      %p21 = scmp.eq.s32.totalorder %s20, 0
      %s23 = sadd.s32 %s22, 1
      %s24 = scalar_select %p21, %s22, %s23
      %p27 = pneg %p21
      %p28 = scmp.eq.s32.totalorder %s12, 1
      %p29 = por %p27, %p28
      %p30 = scmp.ne.s32.totalorder %s22, %s25
      %p31 = scmp.eq.s32.totalorder %s12, 0
      %p32 = por %p30, %p31
      %p33 = scmp.ne.s32.totalorder %s22, %s25
      %p34 = scmp.eq.s32.totalorder %s17, 1
      %p35 = por %p33, %p34
      %p36 = scmp.ne.s32.totalorder %s25, %s26
      %p37 = scmp.eq.s32.totalorder %s17, 0
      %p38 = por %p36, %p37
      %p39 = scmp.ne.s32.totalorder %s25, %s26
      %p40 = scmp.eq.s32.totalorder %s18, 1
      %p41 = por %p39, %p40
      %p43 = scmp.ne.s32.totalorder %s26, %s42
      %p44 = scmp.eq.s32.totalorder %s18, 0
      %p45 = por %p43, %p44
      %s47 = sadd.s32 %s46, 1
      %p50 = scmp.eq.s32.totalorder %s12, 1
      %p51 = scmp.ne.s32.totalorder %s46, %s48
      %p52 = scmp.eq.s32.totalorder %s12, 0
      %p53 = por %p51, %p52
      %p54 = scmp.ne.s32.totalorder %s46, %s48
      %p55 = scmp.eq.s32.totalorder %s17, 1
      %p56 = por %p54, %p55
      %p57 = scmp.ne.s32.totalorder %s48, %s49
      %p58 = scmp.eq.s32.totalorder %s17, 0
      %p59 = por %p57, %p58
      %p60 = scmp.ne.s32.totalorder %s48, %s49
      %p61 = scmp.eq.s32.totalorder %s18, 1
      %p62 = por %p60, %p61
      %p64 = scmp.ne.s32.totalorder %s49, %s63
      %p65 = scmp.eq.s32.totalorder %s18, 0
      %p66 = por %p64, %p65
      %s68 = sadd.s32 %s67, 1
      %p71 = scmp.eq.s32.totalorder %s12, 1
      %p72 = scmp.ne.s32.totalorder %s67, %s69
      %p73 = scmp.eq.s32.totalorder %s12, 0
      %p74 = por %p72, %p73
      %p75 = scmp.ne.s32.totalorder %s67, %s69
      %p76 = scmp.eq.s32.totalorder %s17, 1
      %p77 = por %p75, %p76
      %p78 = scmp.ne.s32.totalorder %s69, %s70
      %p79 = scmp.eq.s32.totalorder %s17, 0
      %p80 = por %p78, %p79
      %p81 = scmp.ne.s32.totalorder %s69, %s70
      %p82 = scmp.eq.s32.totalorder %s18, 1
      %p83 = por %p81, %p82
      %p85 = scmp.ne.s32.totalorder %s70, %s84
      %p86 = scmp.eq.s32.totalorder %s18, 0
      %p87 = por %p85, %p86
      %s88 = ssub.s32 %s12, %s19
      %p89 = scmp.eq.s32.totalorder %s88, 0
      %s91 = sadd.s32 %s90, 1
      %s92 = scalar_select %p89, %s90, %s91
      %p95 = pneg %p89
      %p96 = scmp.eq.s32.totalorder %s12, 1
      %p97 = por %p95, %p96
      %p98 = scmp.ne.s32.totalorder %s90, %s93
      %p99 = scmp.eq.s32.totalorder %s12, 0
      %p100 = por %p98, %p99
      %p101 = scmp.ne.s32.totalorder %s90, %s93
      %p102 = scmp.eq.s32.totalorder %s17, 1
      %p103 = por %p101, %p102
      %p104 = scmp.ne.s32.totalorder %s93, %s94
      %p105 = scmp.eq.s32.totalorder %s17, 0
      %p106 = por %p104, %p105
      %p107 = scmp.ne.s32.totalorder %s93, %s94
      %p108 = scmp.eq.s32.totalorder %s18, 1
      %p109 = por %p107, %p108
      %p111 = scmp.ne.s32.totalorder %s94, %s110
      %p112 = scmp.eq.s32.totalorder %s18, 0
      %p113 = por %p111, %p112
      %s114 = ssub.s32 %s12, %s19
      %p115 = scmp.eq.s32.totalorder %s114, 0
      %s117 = sadd.s32 %s116, 1
      %s118 = scalar_select %p115, %s116, %s117
      %p121 = pneg %p115
      %p122 = scmp.eq.s32.totalorder %s12, 1
      %p123 = por %p121, %p122
      %p124 = scmp.ne.s32.totalorder %s116, %s119
      %p125 = scmp.eq.s32.totalorder %s12, 0
      %p126 = por %p124, %p125
      %p127 = scmp.ne.s32.totalorder %s116, %s119
      %p128 = scmp.eq.s32.totalorder %s17, 1
      %p129 = por %p127, %p128
      %p130 = scmp.ne.s32.totalorder %s119, %s120
      %p131 = scmp.eq.s32.totalorder %s17, 0
      %p132 = por %p130, %p131
      %p133 = scmp.ne.s32.totalorder %s119, %s120
      %p134 = scmp.eq.s32.totalorder %s18, 1
      %p135 = por %p133, %p134
      %p137 = scmp.ne.s32.totalorder %s120, %s136
      %p138 = scmp.eq.s32.totalorder %s18, 0
      %p139 = por %p137, %p138
      %p140 = scmp.le.s32.totalorder 1, %s12
      %p141 = scmp.lt.s32.totalorder %s12, 3
      %p142 = pnand %p140, %p141
      %p143 = pneg %p142
      // Predicated region
      $region9: #{tpu_custom_call.1} parent=5 // pred_check
        _
      $region10: #{tpu_custom_call.1} parent=5 // pred_check_branch
        %145 = sbr.rel (%p142) target = $region12
      $region11: #{tpu_custom_call.1} parent=5 // pred_region
        %s146 = ssub.s32 %s12, 1
        // Predicated region
        $region13: #{tpu_custom_call.1} parent=11 // pred_check
          %p147 = pneg %p59
        $region14: #{tpu_custom_call.1} parent=11 // pred_check_branch
          %149 = sbr.rel (%p147) target = $region16
        $region15: #{tpu_custom_call.1} parent=11 // pred_region
          %s151 = ssub.s32 256, 256
          %152 = vsyncadd [#allocation3], %s151
          %s153 = sshll.u32 [#allocation2], 4
          %s154 = int_to_ptr.vmem [resolvable:$true] %s153
          %159 = dma.hbm_to_vmem [thread:$0]  %s1, 256, %s154, [#allocation3], 128, 128, 8
        $region16: #{tpu_custom_call.1} parent=11 // pred_fallthru
          _
        // Predicated region
        $region17: #{tpu_custom_call.1} parent=11 // pred_check
          %p160 = pneg %p80
        $region18: #{tpu_custom_call.1} parent=11 // pred_check_branch
          %162 = sbr.rel (%p160) target = $region20
        $region19: #{tpu_custom_call.1} parent=11 // pred_region
          _
        $region20: #{tpu_custom_call.1} parent=11 // pred_fallthru
          _
      $region12: #{tpu_custom_call.1} parent=5 // pred_fallthru
        _
      %p163 = scmp.lt.s32.totalorder %s12, 2
      // Predicated region
      $region21: #{tpu_custom_call.1} parent=5 // pred_check
        %p164 = pneg %p163
      $region22: #{tpu_custom_call.1} parent=5 // pred_check_branch
        %166 = sbr.rel (%p164) target = $region24
      $region23: #{tpu_custom_call.1} parent=5 // pred_region
        // Predicated region
        $region25: #{tpu_custom_call.1} parent=23 // pred_check
          %p167 = pneg %p32
        $region26: #{tpu_custom_call.1} parent=23 // pred_check_branch
          %169 = sbr.rel (%p167) target = $region28
        $region27: #{tpu_custom_call.1} parent=23 // pred_region
          %p170 = scmp.lt.s32.totalorder %s12, 1
          %s171 = scalar_select %p170, %s12, 1
          %s172 = smul.addr %s171, 8
          %s173 = scalar_lea.vmem %s0, %s172
        $region28: #{tpu_custom_call.1} parent=23 // pred_fallthru
          _
      $region24: #{tpu_custom_call.1} parent=5 // pred_fallthru
        _
      %p174 = scmp.le.s32.totalorder 1, %s12
      %p175 = scmp.lt.s32.totalorder %s12, 3
      %p176 = pnand %p174, %p175
      %p177 = pneg %p176
      // Predicated region
      $region29: #{tpu_custom_call.1} parent=5 // pred_check
        _
      $region30: #{tpu_custom_call.1} parent=5 // pred_check_branch
        %179 = sbr.rel (%p176) target = $region32
      $region31: #{tpu_custom_call.1} parent=5 // pred_region
        %s180 = ssub.s32 %s12, 1
        // Predicated region
        $region33: #{tpu_custom_call.1} parent=31 // pred_check
          %p181 = pneg %p59
        $region34: #{tpu_custom_call.1} parent=31 // pred_check_branch
          %183 = sbr.rel (%p181) target = $region36
        $region35: #{tpu_custom_call.1} parent=31 // pred_region
          %184 = dma.done [#allocation3], 256
        $region36: #{tpu_custom_call.1} parent=31 // pred_fallthru
          _
        %p185 = scmp.lt.s32.totalorder %s17, 1
        %s186 = scalar_select %p185, %s17, 1
        %s187 = smul.addr %s186, 8
        %s188 = scalar_lea.vmem %s0, %s187
        %p189 = pneg %p38
        %p190 = pneg %p35
        %p191 = pneg %p59
        %p192 = pneg %p56
        %p193 = pneg %p80
        %p194 = pneg %p77
        %p195 = pneg %p106
        %p196 = pneg %p103
        %p197 = scmp.lt.s32.totalorder %s17, 1
        %s198 = scalar_select %p197, %s17, 1
        %s199 = smul.addr %s198, 8
        %s200 = scalar_lea.vmem %s3, %s199
        %p201 = pneg %p132
        %p202 = pneg %p129
        %p203 = scmp.lt.s32.totalorder %s17, 1
        %s204 = scalar_select %p203, %s17, 1
        %s205 = smul.addr %s204, 8
        %s206 = scalar_lea.vmem %s4, %s205
        %p207 = scmp.lt.s32.totalorder %s17, 1
        %s208 = scalar_select %p207, %s17, 1
        %s209 = smul.addr %s208, 8
        %s210 = scalar_lea.vmem %s0, %s209
        %p211 = scmp.lt.s32.totalorder %s17, 1
        %s212 = scalar_select %p211, %s17, 1
        %s213 = smul.addr %s212, 8
        %s214 = scalar_lea.vmem %s3, %s213
        %p215 = scmp.lt.s32.totalorder %s17, 1
        %s216 = scalar_select %p215, %s17, 1
        %s217 = smul.addr %s216, 8
        %s218 = scalar_lea.vmem %s4, %s217
        %v219 = vld [vmem:[#allocation2] sm:$0xff]
        %v220 = vld [vmem:[#allocation2 + $0x8] sm:$0xff]
        %v221 = vld [vmem:[%s210] sm:$0xff]
        %vm222 = vcmask 261120
        %v224 = vsel %vm222, %v219, 0
        %v227 = vsel %vm222, %v220, 0
        %v230 = vsel %vm222, %v221, 0
        %232 = vmatprep.subr.mxu0 0.0
        %233 = vmatpush1.xpose.msra.mxu0 0.0
        %234 = vmatprep.subr.mxu0 0.0
        %235 = vmatpush1.xpose.msra.mxu0 0.0
        %236 = vmatprep.subr.mxu0 0.0
        %237 = vmatpush1.xpose.msra.mxu0 0.0
        %238 = vmatprep.subr.mxu0 0.0
        %239 = vmatpush1.xpose.msra.mxu0 0.0
        %240 = vmatprep.subr.mxu0 0.0
        %241 = vmatpush1.xpose.msra.mxu0 0.0
        %242 = vmatprep.subr.mxu0 0.0
        %243 = vmatpush1.xpose.msra.mxu0 0.0
        %244 = vmatprep.subr.mxu0 0.0
        %245 = vmatpush1.xpose.msra.mxu0 0.0
        %246 = vmatprep.subr.mxu0 0.0
        %247 = vmatpush1.xpose.msra.mxu0 0.0
        %248 = vmatprep.subr.mxu0 0.0
        %249 = vmatpush1.xpose.msra.mxu0 0.0
        %250 = vmatprep.subr.mxu0 0.0
        %251 = vmatpush1.xpose.msra.mxu0 0.0
        %252 = vmatprep.subr.mxu0 0.0
        %253 = vmatpush1.xpose.msra.mxu0 0.0
        %254 = vmatprep.subr.mxu0 0.0
        %255 = vmatpush1.xpose.msra.mxu0 0.0
        %256 = vmatprep.subr.mxu0 0.0
        %257 = vmatpush1.xpose.msra.mxu0 0.0
        %258 = vmatprep.subr.mxu0 0.0
        %259 = vmatpush1.xpose.msra.mxu0 0.0
        %260 = vmatprep.subr.mxu0 0.0
        %261 = vmatpush1.xpose.msra.mxu0 0.0
        %262 = vmatprep.subr.mxu0 0.0
        %263 = vmatpush1.xpose.msra.mxu0 %v230
        %264 = vmatprep.subr.mxu0 0.0
        %265 = vmatpush2.xpose.msra.mxu0 0.0
        %266 = vmatprep.subr.mxu0 0.0
        %267 = vmatpush2.xpose.msra.mxu0 0.0
        %268 = vmatprep.subr.mxu0 0.0
        %269 = vmatpush2.xpose.msra.mxu0 0.0
        %270 = vmatprep.subr.mxu0 0.0
        %271 = vmatpush2.xpose.msra.mxu0 0.0
        %272 = vmatprep.subr.mxu0 0.0
        %273 = vmatpush2.xpose.msra.mxu0 0.0
        %274 = vmatprep.subr.mxu0 0.0
        %275 = vmatpush2.xpose.msra.mxu0 0.0
        %276 = vmatprep.subr.mxu0 0.0
        %277 = vmatpush2.xpose.msra.mxu0 0.0
        %278 = vmatprep.subr.mxu0 0.0
        %279 = vmatpush2.xpose.msra.mxu0 0.0
        %280 = vmatprep.subr.mxu0 0.0
        %281 = vmatpush2.xpose.msra.mxu0 0.0
        %282 = vmatprep.subr.mxu0 0.0
        %283 = vmatpush2.xpose.msra.mxu0 0.0
        %284 = vmatprep.subr.mxu0 0.0
        %285 = vmatpush2.xpose.msra.mxu0 0.0
        %286 = vmatprep.subr.mxu0 0.0
        %287 = vmatpush2.xpose.msra.mxu0 0.0
        %288 = vmatprep.subr.mxu0 0.0
        %289 = vmatpush2.xpose.msra.mxu0 0.0
        %290 = vmatprep.subr.mxu0 0.0
        %291 = vmatpush2.xpose.msra.mxu0 0.0
        %292 = vmatprep.subr.mxu0 0.0
        %293 = vmatpush2.xpose.msra.mxu0 0.0
        %294 = vmatprep.subr.mxu0 0.0
        %295 = vmatpush2.xpose.msra.mxu0 0.0
        %296 = vmatprep.mubr.f32.mxu0 0.0
        %297 = vmatmul.mubr.f32.gmra.mxu0 %v224
        %v298 = vpop.f32.mrf.mxu0
        %v299 = vadd.f32 0.0, %v298
        %v300 = vpop.f32.mrf.mxu0
        %301 = vmatprep.mubr.f32.mxu0 0.0
        %302 = vmatmul.mubr.f32.gmra.mxu0 %v227
        %v303 = vpop.f32.mrf.mxu0
        %v304 = vadd.f32 0.0, %v303
        %v305 = vpop.f32.mrf.mxu0
        %306 = vdwg.mxu0
        %vm307 = vcmask 64512
        %v308 = vsel %vm307, %v299, -inf
        %v309 = vsel %vm307, %v304, -inf
        %v310 = vmax.f32 %v308, %v309
        %v311 = vrot.slane %v310, 4
        %v312 = vmax.f32 %v310, %v311
        %v313 = vrot.slane %v312, 2
        %v314 = vmax.f32 %v312, %v313
        %v315 = vrot.slane %v314, 1
        %v316 = vmax.f32 %v314, %v315
        %v317 = vsub.f32 %v299, %v316
        %v318 = vsub.f32 %v304, %v316
        %v319 = vmul.f32 %v317, 1.442695
        %v320 = vpow.pop %v319
        %v321 = vmul.f32 %v318, 1.442695
        %v322 = vpow.pop %v321
        %v323 = vsel %vm307, %v320, 0.0
        %v324 = vsel %vm307, %v322, 0.0
        %v325 = vadd.f32 %v323, %v324
        %v326 = vrot.slane %v325, 4
        %v327 = vadd.f32 %v325, %v326
        %v328 = vrot.slane %v327, 2
        %v329 = vadd.f32 %v327, %v328
        %v330 = vrot.slane %v329, 1
        %v331 = vadd.f32 %v329, %v330
        %v332 = vrcp.pop %v331
        %v333 = vmul.f32 %v320, %v332
        %v334 = vmul.f32 %v322, %v332
        %v335 = vld [vmem:[%s2] sm:$0xff]
        %v336 = vld [vmem:[%s2 + $0x8] sm:$0xff]
        %338 = vset.pattern.permute.xlu0 0
        %339 = vperm.xlu0 %338, %v335
        %v340 = vpop.permute.xlu0 %339
        %343 = vset.pattern.permute.xlu0 0
        %344 = vperm.xlu0 %343, %v336
        %v345 = vpop.permute.xlu0 %344
        %v347 = vadd.f32 %v333, %v340
        %v348 = vadd.f32 %v334, %v345
        %v349 = vlaneseq
        %v350 = vshrl.u32 %v349, 7
        %v351 = vadd.s32 %v350, 8
        %v352 = vsel %vm307, %v347, -inf
        %v353 = vsel %vm307, %v348, -inf
        %v354 = vmax.f32 %v352, %v353
        %v355 = vrot.slane %v354, 4
        %v356 = vmax.f32 %v354, %v355
        %v357 = vrot.slane %v356, 2
        %v358 = vmax.f32 %v356, %v357
        %v359 = vrot.slane %v358, 1
        %v360 = vmax.f32 %v358, %v359
        %vm361 = vcmp.eq.f32.partialorder %v347, %v360
        %vm362 = vcmp.eq.f32.partialorder %v348, %v360
        %v363 = vsel %vm361, %v350, 16
        %v364 = vsel %vm362, %v351, 16
        %v365 = vsel %vm307, %v363, 2147483647
        %v366 = vsel %vm307, %v364, 2147483647
        %vm367 = vcmp.lt.s32.totalorder %v365, %v366
        %v368 = vsel %vm367, %v365, %v366
        %v369 = vrot.slane %v368, 4
        %vm370 = vcmp.lt.s32.totalorder %v368, %v369
        %v371 = vsel %vm370, %v368, %v369
        %v372 = vrot.slane %v371, 2
        %vm373 = vcmp.lt.s32.totalorder %v371, %v372
        %v374 = vsel %vm373, %v371, %v372
        %v375 = vrot.slane %v374, 1
        %vm376 = vcmp.lt.s32.totalorder %v374, %v375
        %v377 = vsel %vm376, %v374, %v375
        %vm378 = vcmp.eq.s32.totalorder %v350, %v377
        %vm379 = vcmp.eq.s32.totalorder %v351, %v377
        %v380 = vsel %vm378, -inf, %v347
        %v381 = vsel %vm379, -inf, %v348
        %v382 = vsel %vm307, %v380, -inf
        %v383 = vsel %vm307, %v381, -inf
        %v384 = vmax.f32 %v382, %v383
        %v385 = vrot.slane %v384, 4
        %v386 = vmax.f32 %v384, %v385
        %v387 = vrot.slane %v386, 2
        %v388 = vmax.f32 %v386, %v387
        %v389 = vrot.slane %v388, 1
        %v390 = vmax.f32 %v388, %v389
        %vm391 = vcmp.eq.f32.partialorder %v380, %v390
        %vm392 = vcmp.eq.f32.partialorder %v381, %v390
        %v393 = vsel %vm391, %v350, 16
        %v394 = vsel %vm392, %v351, 16
        %v395 = vsel %vm307, %v393, 2147483647
        %v396 = vsel %vm307, %v394, 2147483647
        %vm397 = vcmp.lt.s32.totalorder %v395, %v396
        %v398 = vsel %vm397, %v395, %v396
        %v399 = vrot.slane %v398, 4
        %vm400 = vcmp.lt.s32.totalorder %v398, %v399
        %v401 = vsel %vm400, %v398, %v399
        %v402 = vrot.slane %v401, 2
        %vm403 = vcmp.lt.s32.totalorder %v401, %v402
        %v404 = vsel %vm403, %v401, %v402
        %v405 = vrot.slane %v404, 1
        %vm406 = vcmp.lt.s32.totalorder %v404, %v405
        %v407 = vsel %vm406, %v404, %v405
        %vm408 = vcmp.eq.s32.totalorder %v350, %v407
        %vm409 = vcmp.eq.s32.totalorder %v351, %v407
        %v410 = vsel %vm408, -inf, %v380
        %v411 = vsel %vm409, -inf, %v381
        %v412 = vsel %vm307, %v410, -inf
        %v413 = vsel %vm307, %v411, -inf
        %v414 = vmax.f32 %v412, %v413
        %v415 = vrot.slane %v414, 4
        %v416 = vmax.f32 %v414, %v415
        %v417 = vrot.slane %v416, 2
        %v418 = vmax.f32 %v416, %v417
        %v419 = vrot.slane %v418, 1
        %v420 = vmax.f32 %v418, %v419
        %vm421 = vcmp.eq.f32.partialorder %v410, %v420
        %vm422 = vcmp.eq.f32.partialorder %v411, %v420
        %v423 = vsel %vm421, %v350, 16
        %v424 = vsel %vm422, %v351, 16
        %v425 = vsel %vm307, %v423, 2147483647
        %v426 = vsel %vm307, %v424, 2147483647
        %vm427 = vcmp.lt.s32.totalorder %v425, %v426
        %v428 = vsel %vm427, %v425, %v426
        %v429 = vrot.slane %v428, 4
        %vm430 = vcmp.lt.s32.totalorder %v428, %v429
        %v431 = vsel %vm430, %v428, %v429
        %v432 = vrot.slane %v431, 2
        %vm433 = vcmp.lt.s32.totalorder %v431, %v432
        %v434 = vsel %vm433, %v431, %v432
        %v435 = vrot.slane %v434, 1
        %vm436 = vcmp.lt.s32.totalorder %v434, %v435
        %v437 = vsel %vm436, %v434, %v435
        %vm438 = vcmp.eq.s32.totalorder %v350, %v437
        %vm439 = vcmp.eq.s32.totalorder %v351, %v437
        %v440 = vsel %vm438, -inf, %v410
        %v441 = vsel %vm439, -inf, %v411
        %v442 = vsel %vm307, %v440, -inf
        %v443 = vsel %vm307, %v441, -inf
        %v444 = vmax.f32 %v442, %v443
        %v445 = vrot.slane %v444, 4
        %v446 = vmax.f32 %v444, %v445
        %v447 = vrot.slane %v446, 2
        %v448 = vmax.f32 %v446, %v447
        %v449 = vrot.slane %v448, 1
        %v450 = vmax.f32 %v448, %v449
        %vm451 = vcmp.eq.f32.partialorder %v440, %v450
        %vm452 = vcmp.eq.f32.partialorder %v441, %v450
        %v453 = vsel %vm451, %v350, 16
        %v454 = vsel %vm452, %v351, 16
        %v455 = vsel %vm307, %v453, 2147483647
        %v456 = vsel %vm307, %v454, 2147483647
        %vm457 = vcmp.lt.s32.totalorder %v455, %v456
        %v458 = vsel %vm457, %v455, %v456
        %v459 = vrot.slane %v458, 4
        %vm460 = vcmp.lt.s32.totalorder %v458, %v459
        %v461 = vsel %vm460, %v458, %v459
        %v462 = vrot.slane %v461, 2
        %vm463 = vcmp.lt.s32.totalorder %v461, %v462
        %v464 = vsel %vm463, %v461, %v462
        %v465 = vrot.slane %v464, 1
        %vm466 = vcmp.lt.s32.totalorder %v464, %v465
        %v467 = vsel %vm466, %v464, %v465
        %vm468 = vcmp.eq.s32.totalorder %v350, %v467
        %vm469 = vcmp.eq.s32.totalorder %v351, %v467
        %v470 = vsel %vm468, -inf, %v440
        %v471 = vsel %vm469, -inf, %v441
        %v472 = vsel %vm307, %v470, -inf
        %v473 = vsel %vm307, %v471, -inf
        %v474 = vmax.f32 %v472, %v473
        %v475 = vrot.slane %v474, 4
        %v476 = vmax.f32 %v474, %v475
        %v477 = vrot.slane %v476, 2
        %v478 = vmax.f32 %v476, %v477
        %v479 = vrot.slane %v478, 1
        %v480 = vmax.f32 %v478, %v479
        %vm481 = vcmp.eq.f32.partialorder %v470, %v480
        %vm482 = vcmp.eq.f32.partialorder %v471, %v480
        %v483 = vsel %vm481, %v350, 16
        %v484 = vsel %vm482, %v351, 16
        %v485 = vsel %vm307, %v483, 2147483647
        %v486 = vsel %vm307, %v484, 2147483647
        %vm487 = vcmp.lt.s32.totalorder %v485, %v486
        %v488 = vsel %vm487, %v485, %v486
        %v489 = vrot.slane %v488, 4
        %vm490 = vcmp.lt.s32.totalorder %v488, %v489
        %v491 = vsel %vm490, %v488, %v489
        %v492 = vrot.slane %v491, 2
        %vm493 = vcmp.lt.s32.totalorder %v491, %v492
        %v494 = vsel %vm493, %v491, %v492
        %v495 = vrot.slane %v494, 1
        %vm496 = vcmp.lt.s32.totalorder %v494, %v495
        %v497 = vsel %vm496, %v494, %v495
        %vm498 = vcmp.eq.s32.totalorder %v350, %v497
        %vm499 = vcmp.eq.s32.totalorder %v351, %v497
        %v500 = vsel %vm498, -inf, %v470
        %v501 = vsel %vm499, -inf, %v471
        %v502 = vsel %vm307, %v500, -inf
        %v503 = vsel %vm307, %v501, -inf
        %v504 = vmax.f32 %v502, %v503
        %v505 = vrot.slane %v504, 4
        %v506 = vmax.f32 %v504, %v505
        %v507 = vrot.slane %v506, 2
        %v508 = vmax.f32 %v506, %v507
        %v509 = vrot.slane %v508, 1
        %v510 = vmax.f32 %v508, %v509
        %vm511 = vcmp.eq.f32.partialorder %v500, %v510
        %vm512 = vcmp.eq.f32.partialorder %v501, %v510
        %v513 = vsel %vm511, %v350, 16
        %v514 = vsel %vm512, %v351, 16
        %v515 = vsel %vm307, %v513, 2147483647
        %v516 = vsel %vm307, %v514, 2147483647
        %vm517 = vcmp.lt.s32.totalorder %v515, %v516
        %v518 = vsel %vm517, %v515, %v516
        %v519 = vrot.slane %v518, 4
        %vm520 = vcmp.lt.s32.totalorder %v518, %v519
        %v521 = vsel %vm520, %v518, %v519
        %v522 = vrot.slane %v521, 2
        %vm523 = vcmp.lt.s32.totalorder %v521, %v522
        %v524 = vsel %vm523, %v521, %v522
        %v525 = vrot.slane %v524, 1
        %vm526 = vcmp.lt.s32.totalorder %v524, %v525
        %v527 = vsel %vm526, %v524, %v525
        %vm528 = vcmp.eq.s32.totalorder %v350, %v527
        %vm529 = vcmp.eq.s32.totalorder %v351, %v527
        %v530 = vsel %vm528, -inf, %v500
        %v531 = vsel %vm529, -inf, %v501
        %v532 = vsel %vm307, %v530, -inf
        %v533 = vsel %vm307, %v531, -inf
        %v534 = vmax.f32 %v532, %v533
        %v535 = vrot.slane %v534, 4
        %v536 = vmax.f32 %v534, %v535
        %v537 = vrot.slane %v536, 2
        %v538 = vmax.f32 %v536, %v537
        %v539 = vrot.slane %v538, 1
        %v540 = vmax.f32 %v538, %v539
        %vm541 = vcmp.eq.f32.partialorder %v530, %v540
        %vm542 = vcmp.eq.f32.partialorder %v531, %v540
        %v543 = vsel %vm541, %v350, 16
        %v544 = vsel %vm542, %v351, 16
        %v545 = vsel %vm307, %v543, 2147483647
        %v546 = vsel %vm307, %v544, 2147483647
        %vm547 = vcmp.lt.s32.totalorder %v545, %v546
        %v548 = vsel %vm547, %v545, %v546
        %v549 = vrot.slane %v548, 4
        %vm550 = vcmp.lt.s32.totalorder %v548, %v549
        %v551 = vsel %vm550, %v548, %v549
        %v552 = vrot.slane %v551, 2
        %vm553 = vcmp.lt.s32.totalorder %v551, %v552
        %v554 = vsel %vm553, %v551, %v552
        %v555 = vrot.slane %v554, 1
        %vm556 = vcmp.lt.s32.totalorder %v554, %v555
        %v557 = vsel %vm556, %v554, %v555
        %vm558 = vcmp.eq.s32.totalorder %v350, %v557
        %vm559 = vcmp.eq.s32.totalorder %v351, %v557
        %v560 = vsel %vm558, -inf, %v530
        %v561 = vsel %vm559, -inf, %v531
        %v562 = vsel %vm307, %v560, -inf
        %v563 = vsel %vm307, %v561, -inf
        %v564 = vmax.f32 %v562, %v563
        %v565 = vrot.slane %v564, 4
        %v566 = vmax.f32 %v564, %v565
        %v567 = vrot.slane %v566, 2
        %v568 = vmax.f32 %v566, %v567
        %v569 = vrot.slane %v568, 1
        %v570 = vmax.f32 %v568, %v569
        %vm571 = vcmp.eq.f32.partialorder %v560, %v570
        %vm572 = vcmp.eq.f32.partialorder %v561, %v570
        %v573 = vsel %vm571, %v350, 16
        %v574 = vsel %vm572, %v351, 16
        %v575 = vsel %vm307, %v573, 2147483647
        %v576 = vsel %vm307, %v574, 2147483647
        %vm577 = vcmp.lt.s32.totalorder %v575, %v576
        %v578 = vsel %vm577, %v575, %v576
        %v579 = vrot.slane %v578, 4
        %vm580 = vcmp.lt.s32.totalorder %v578, %v579
        %v581 = vsel %vm580, %v578, %v579
        %v582 = vrot.slane %v581, 2
        %vm583 = vcmp.lt.s32.totalorder %v581, %v582
        %v584 = vsel %vm583, %v581, %v582
        %v585 = vrot.slane %v584, 1
        %vm586 = vcmp.lt.s32.totalorder %v584, %v585
        %v587 = vsel %vm586, %v584, %v585
        %vm588 = vcmask 1040384
        %v589 = vsel %vm588, %v360, %v390
        %vm590 = vcmask 1041408
        %v591 = vsel %vm590, %v589, %v420
        %vm592 = vcmask 1042432
        %v593 = vsel %vm592, %v591, %v450
        %vm594 = vcmask 1043456
        %v595 = vsel %vm594, %v593, %v480
        %vm596 = vcmask 1044480
        %v597 = vsel %vm596, %v595, %v510
        %vm598 = vcmask 1045504
        %v599 = vsel %vm598, %v597, %v540
        %vm600 = vcmask 1046528
        %v601 = vsel %vm600, %v599, %v570
        %v602 = vsel %vm588, %v377, %v407
        %v603 = vsel %vm590, %v602, %v437
        %v604 = vsel %vm592, %v603, %v467
        %v605 = vsel %vm594, %v604, %v497
        %v606 = vsel %vm596, %v605, %v527
        %v607 = vsel %vm598, %v606, %v557
        %v608 = vsel %vm600, %v607, %v587
        %609 = vxpose.xlu0.b32.start [1/16] %v601, 128
        %610 = vxpose.xlu0.b32.cont [2/16] 0.0, 128
        %611 = vxpose.xlu0.b32.cont [3/16] 0.0, 128
        %612 = vxpose.xlu0.b32.cont [4/16] 0.0, 128
        %613 = vxpose.xlu0.b32.cont [5/16] 0.0, 128
        %614 = vxpose.xlu0.b32.cont [6/16] 0.0, 128
        %615 = vxpose.xlu0.b32.cont [7/16] 0.0, 128
        %616 = vxpose.xlu0.b32.cont [8/16] 0.0, 128
        %617 = vxpose.xlu0.b32.cont [9/16] 0.0, 128
        %618 = vxpose.xlu0.b32.cont [10/16] 0.0, 128
        %619 = vxpose.xlu0.b32.cont [11/16] 0.0, 128
        %620 = vxpose.xlu0.b32.cont [12/16] 0.0, 128
        %621 = vxpose.xlu0.b32.cont [13/16] 0.0, 128
        %622 = vxpose.xlu0.b32.cont [14/16] 0.0, 128
        %623 = vxpose.xlu0.b32.cont [15/16] 0.0, 128
        %624 = vxpose.xlu0.b32.end [16/16] 0.0, 128
        %v625 = vpop.trf.xlu0
        %v626 = vpop.trf.xlu0
        %v627 = vpop.trf.xlu0
        %v628 = vpop.trf.xlu0
        %v629 = vpop.trf.xlu0
        %v630 = vpop.trf.xlu0
        %v631 = vpop.trf.xlu0
        %v632 = vpop.trf.xlu0
        %v633 = vpop.trf.xlu0
        %v634 = vpop.trf.xlu0
        %v635 = vpop.trf.xlu0
        %v636 = vpop.trf.xlu0
        %v637 = vpop.trf.xlu0
        %v638 = vpop.trf.xlu0
        %v639 = vpop.trf.xlu0
        %v640 = vpop.trf.xlu0
        %641 = vst.msk [vmem:[%s214] sm:$0xff] %vm307, %v625
        %642 = vxpose.xlu0.b32.start [1/16] %v608, 128
        %643 = vxpose.xlu0.b32.cont [2/16] 0, 128
        %644 = vxpose.xlu0.b32.cont [3/16] 0, 128
        %645 = vxpose.xlu0.b32.cont [4/16] 0, 128
        %646 = vxpose.xlu0.b32.cont [5/16] 0, 128
        %647 = vxpose.xlu0.b32.cont [6/16] 0, 128
        %648 = vxpose.xlu0.b32.cont [7/16] 0, 128
        %649 = vxpose.xlu0.b32.cont [8/16] 0, 128
        %650 = vxpose.xlu0.b32.cont [9/16] 0, 128
        %651 = vxpose.xlu0.b32.cont [10/16] 0, 128
        %652 = vxpose.xlu0.b32.cont [11/16] 0, 128
        %653 = vxpose.xlu0.b32.cont [12/16] 0, 128
        %654 = vxpose.xlu0.b32.cont [13/16] 0, 128
        %655 = vxpose.xlu0.b32.cont [14/16] 0, 128
        %656 = vxpose.xlu0.b32.cont [15/16] 0, 128
        %657 = vxpose.xlu0.b32.end [16/16] 0, 128
        %v658 = vpop.trf.xlu0
        %v659 = vpop.trf.xlu0
        %v660 = vpop.trf.xlu0
        %v661 = vpop.trf.xlu0
        %v662 = vpop.trf.xlu0
        %v663 = vpop.trf.xlu0
        %v664 = vpop.trf.xlu0
        %v665 = vpop.trf.xlu0
        %v666 = vpop.trf.xlu0
        %v667 = vpop.trf.xlu0
        %v668 = vpop.trf.xlu0
        %v669 = vpop.trf.xlu0
        %v670 = vpop.trf.xlu0
        %v671 = vpop.trf.xlu0
        %v672 = vpop.trf.xlu0
        %v673 = vpop.trf.xlu0
        %674 = vst.msk [vmem:[%s218] sm:$0xff] %vm307, %v658
        %p675 = scmp.lt.s32.totalorder %s17, 1
        %s676 = scalar_select %p675, %s17, 1
        %s677 = smul.addr %s676, 8
        %s678 = scalar_lea.vmem %s3, %s677
        %p679 = scmp.lt.s32.totalorder %s17, 1
        %s680 = scalar_select %p679, %s17, 1
        %s681 = smul.addr %s680, 8
        %s682 = scalar_lea.vmem %s4, %s681
        // Predicated region
        $region37: #{tpu_custom_call.1} parent=31 // pred_check
          %p683 = pneg %p103
        $region38: #{tpu_custom_call.1} parent=31 // pred_check_branch
          %685 = sbr.rel (%p683) target = $region40
        $region39: #{tpu_custom_call.1} parent=31 // pred_region
          _
        $region40: #{tpu_custom_call.1} parent=31 // pred_fallthru
          _
        // Predicated region
        $region41: #{tpu_custom_call.1} parent=31 // pred_check
          %p686 = pneg %p129
        $region42: #{tpu_custom_call.1} parent=31 // pred_check_branch
          %688 = sbr.rel (%p686) target = $region44
        $region43: #{tpu_custom_call.1} parent=31 // pred_region
          _
        $region44: #{tpu_custom_call.1} parent=31 // pred_fallthru
          _
      $region32: #{tpu_custom_call.1} parent=5 // pred_fallthru
        _
      %p689 = scmp.le.s32.totalorder 2, %s12
      // Predicated region
      $region45: #{tpu_custom_call.1} parent=5 // pred_check
        %p690 = pneg %p689
      $region46: #{tpu_custom_call.1} parent=5 // pred_check_branch
        %692 = sbr.rel (%p690) target = $region48
      $region47: #{tpu_custom_call.1} parent=5 // pred_region
        %s693 = ssub.s32 %s12, 2
        // Predicated region
        $region49: #{tpu_custom_call.1} parent=47 // pred_check
          %p694 = pneg %p109
        $region50: #{tpu_custom_call.1} parent=47 // pred_check_branch
          %696 = sbr.rel (%p694) target = $region52
        $region51: #{tpu_custom_call.1} parent=47 // pred_region
          %p697 = scmp.lt.s32.totalorder %s18, 1
          %s698 = scalar_select %p697, %s18, 1
          %s699 = smul.addr %s698, 8
          %s700 = scalar_lea.vmem %s3, %s699
        $region52: #{tpu_custom_call.1} parent=47 // pred_fallthru
          _
        // Predicated region
        $region53: #{tpu_custom_call.1} parent=47 // pred_check
          %p701 = pneg %p135
        $region54: #{tpu_custom_call.1} parent=47 // pred_check_branch
          %703 = sbr.rel (%p701) target = $region56
        $region55: #{tpu_custom_call.1} parent=47 // pred_region
          %p704 = scmp.lt.s32.totalorder %s18, 1
          %s705 = scalar_select %p704, %s18, 1
          %s706 = smul.addr %s705, 8
          %s707 = scalar_lea.vmem %s4, %s706
        $region56: #{tpu_custom_call.1} parent=47 // pred_fallthru
          _
      $region48: #{tpu_custom_call.1} parent=5 // pred_fallthru
        _
    $region6: #{tpu_custom_call.1} parent=1 // loop_footer
      %s16 = sadd.s32 1, %s12
    $region7: #{tpu_custom_call.1} parent=1 // loop_footer_branch
      %11 = sbr.rel target = $region3
    $region8: #{tpu_custom_call.1} parent=1 // loop_exit
      _
    %708 = vsyncpa [#allocation3], 1
    %s709 = scalar_lea.sflag [#allocation3], 1
    %710 = vsyncpa %s709, 1

// kernel: tpu_custom_call.1
$region0: #{tpu_custom_call.1}
  #allocation0 [shape = 'u32[]', space=smem, size = 0x4, offset = 0x4, fixed_abs, tag = 'smem constant byte address 0x4 - core index']
  #allocation1 [shape = 'u32[144,128]{1,0:T(1,128)}', space=vmem, size = 0x12000, scoped, tag = 'internal scratch']
  %s0 = inlined_call_operand.vmem [shape: f32[16,32], index: 0, kind: input, shape index: {}]
  %s1 = inlined_call_operand.hbm [shape: f32[16,32], index: 1, kind: input, shape index: {}]
  %s2 = inlined_call_operand.vmem [shape: f32[16,1], index: 2, kind: input, shape index: {}]
  %s3 = inlined_call_operand.vmem [shape: f32[16,8], index: 3, kind: output, shape index: {0}]
  %s4 = inlined_call_operand.vmem [shape: s32[16,8], index: 4, kind: output, shape index: {1}]
  %5 = xla_tuple %s3, %s4
  %s6 = sld [smem:[#allocation0]]
  $region57: #{tpu_custom_call.1} parent=0
    _
  %s8 = ssub.s32 1, %s6
  %s9 = scalar_select 0, %s8, %s6
  $region1: #{tpu_custom_call.1} parent=0
    #allocation2 [shape = 'u8[8192]{0}', space=vmem, size = 0x2000, scoped, tag = 'input window, operand 1, single buffered']
    #allocation3 [shape = 's32[2]{0}', space=sflag, size = 0x8, scoped, tag = 'scoped memory for tpu_custom_call.1']
    %10 = vsyncpa [#allocation3], 0
    loop: start=0, step=1, limit=4
    $region2: #{tpu_custom_call.1} parent=1 // loop_pre_header
      _
    $region3: #{tpu_custom_call.1} parent=1 // loop_header
      %s12 = sphi 0, %s16
      %p13 = scmp.ge.s32.totalorder %s12, 4
      %s22 = sphi 0, %s24
      %s25 = sphi 0, %s22
      %s26 = sphi 0, %s25
      %s42 = sphi 0, %s26
      %s46 = sphi 0, %s46
      %s48 = sphi 0, %s46
      %s49 = sphi 0, %s48
      %s63 = sphi 0, %s49
      %s67 = sphi 0, %s67
      %s69 = sphi 0, %s67
      %s70 = sphi 0, %s69
      %s84 = sphi 0, %s70
      %s90 = sphi 0, %s92
      %s93 = sphi 0, %s90
      %s94 = sphi 0, %s93
      %s110 = sphi 0, %s94
      %s116 = sphi 0, %s118
      %s119 = sphi 0, %s116
      %s120 = sphi 0, %s119
      %s136 = sphi 0, %s120
    $region4: #{tpu_custom_call.1} parent=1 // loop_header_branch
      %15 = sbr.rel (%p13) target = $region8
    $region5: #{tpu_custom_call.1} parent=1 // loop_body
      %s17 = ssub.s32 %s12, 1
      %s18 = ssub.s32 %s12, 2
      %s19 = sadd.s32 %s12, 1
      %s20 = ssub.s32 %s12, %s19
      %p21 = scmp.eq.s32.totalorder %s20, 0
      %s23 = sadd.s32 %s22, 1
      %s24 = scalar_select %p21, %s22, %s23
      %p27 = pneg %p21
      %p28 = scmp.eq.s32.totalorder %s12, 1
      %p29 = por %p27, %p28
      %p30 = scmp.ne.s32.totalorder %s22, %s25
      %p31 = scmp.eq.s32.totalorder %s12, 0
      %p32 = por %p30, %p31
      %p33 = scmp.ne.s32.totalorder %s22, %s25
      %p34 = scmp.eq.s32.totalorder %s17, 1
      %p35 = por %p33, %p34
      %p36 = scmp.ne.s32.totalorder %s25, %s26
      %p37 = scmp.eq.s32.totalorder %s17, 0
      %p38 = por %p36, %p37
      %p39 = scmp.ne.s32.totalorder %s25, %s26
      %p40 = scmp.eq.s32.totalorder %s18, 1
      %p41 = por %p39, %p40
      %p43 = scmp.ne.s32.totalorder %s26, %s42
      %p44 = scmp.eq.s32.totalorder %s18, 0
      %p45 = por %p43, %p44
      %s47 = sadd.s32 %s46, 1
      %p50 = scmp.eq.s32.totalorder %s12, 1
      %p51 = scmp.ne.s32.totalorder %s46, %s48
      %p52 = scmp.eq.s32.totalorder %s12, 0
      %p53 = por %p51, %p52
      %p54 = scmp.ne.s32.totalorder %s46, %s48
      %p55 = scmp.eq.s32.totalorder %s17, 1
      %p56 = por %p54, %p55
      %p57 = scmp.ne.s32.totalorder %s48, %s49
      %p58 = scmp.eq.s32.totalorder %s17, 0
      %p59 = por %p57, %p58
      %p60 = scmp.ne.s32.totalorder %s48, %s49
      %p61 = scmp.eq.s32.totalorder %s18, 1
      %p62 = por %p60, %p61
      %p64 = scmp.ne.s32.totalorder %s49, %s63
      %p65 = scmp.eq.s32.totalorder %s18, 0
      %p66 = por %p64, %p65
      %s68 = sadd.s32 %s67, 1
      %p71 = scmp.eq.s32.totalorder %s12, 1
      %p72 = scmp.ne.s32.totalorder %s67, %s69
      %p73 = scmp.eq.s32.totalorder %s12, 0
      %p74 = por %p72, %p73
      %p75 = scmp.ne.s32.totalorder %s67, %s69
      %p76 = scmp.eq.s32.totalorder %s17, 1
      %p77 = por %p75, %p76
      %p78 = scmp.ne.s32.totalorder %s69, %s70
      %p79 = scmp.eq.s32.totalorder %s17, 0
      %p80 = por %p78, %p79
      %p81 = scmp.ne.s32.totalorder %s69, %s70
      %p82 = scmp.eq.s32.totalorder %s18, 1
      %p83 = por %p81, %p82
      %p85 = scmp.ne.s32.totalorder %s70, %s84
      %p86 = scmp.eq.s32.totalorder %s18, 0
      %p87 = por %p85, %p86
      %s88 = ssub.s32 %s12, %s19
      %p89 = scmp.eq.s32.totalorder %s88, 0
      %s91 = sadd.s32 %s90, 1
      %s92 = scalar_select %p89, %s90, %s91
      %p95 = pneg %p89
      %p96 = scmp.eq.s32.totalorder %s12, 1
      %p97 = por %p95, %p96
      %p98 = scmp.ne.s32.totalorder %s90, %s93
      %p99 = scmp.eq.s32.totalorder %s12, 0
      %p100 = por %p98, %p99
      %p101 = scmp.ne.s32.totalorder %s90, %s93
      %p102 = scmp.eq.s32.totalorder %s17, 1
      %p103 = por %p101, %p102
      %p104 = scmp.ne.s32.totalorder %s93, %s94
      %p105 = scmp.eq.s32.totalorder %s17, 0
      %p106 = por %p104, %p105
      %p107 = scmp.ne.s32.totalorder %s93, %s94
      %p108 = scmp.eq.s32.totalorder %s18, 1
      %p109 = por %p107, %p108
      %p111 = scmp.ne.s32.totalorder %s94, %s110
      %p112 = scmp.eq.s32.totalorder %s18, 0
      %p113 = por %p111, %p112
      %s114 = ssub.s32 %s12, %s19
      %p115 = scmp.eq.s32.totalorder %s114, 0
      %s117 = sadd.s32 %s116, 1
      %s118 = scalar_select %p115, %s116, %s117
      %p121 = pneg %p115
      %p122 = scmp.eq.s32.totalorder %s12, 1
      %p123 = por %p121, %p122
      %p124 = scmp.ne.s32.totalorder %s116, %s119
      %p125 = scmp.eq.s32.totalorder %s12, 0
      %p126 = por %p124, %p125
      %p127 = scmp.ne.s32.totalorder %s116, %s119
      %p128 = scmp.eq.s32.totalorder %s17, 1
      %p129 = por %p127, %p128
      %p130 = scmp.ne.s32.totalorder %s119, %s120
      %p131 = scmp.eq.s32.totalorder %s17, 0
      %p132 = por %p130, %p131
      %p133 = scmp.ne.s32.totalorder %s119, %s120
      %p134 = scmp.eq.s32.totalorder %s18, 1
      %p135 = por %p133, %p134
      %p137 = scmp.ne.s32.totalorder %s120, %s136
      %p138 = scmp.eq.s32.totalorder %s18, 0
      %p139 = por %p137, %p138
      %p140 = scmp.le.s32.totalorder 1, %s12
      %p141 = scmp.lt.s32.totalorder %s12, 3
      %p142 = pnand %p140, %p141
      %p143 = pneg %p142
      // Predicated region
      $region9: #{tpu_custom_call.1} parent=5 // pred_check
        _
      $region10: #{tpu_custom_call.1} parent=5 // pred_check_branch
        %145 = sbr.rel (%p142) target = $region12
      $region11: #{tpu_custom_call.1} parent=5 // pred_region
        %s146 = ssub.s32 %s12, 1
        // Predicated region
        $region13: #{tpu_custom_call.1} parent=11 // pred_check
          %p147 = pneg %p59
        $region14: #{tpu_custom_call.1} parent=11 // pred_check_branch
          %149 = sbr.rel (%p147) target = $region16
        $region15: #{tpu_custom_call.1} parent=11 // pred_region
          %s151 = ssub.s32 256, 256
          %152 = vsyncadd [#allocation3], %s151
          %s153 = sshll.u32 [#allocation2], 4
          %s154 = int_to_ptr.vmem [resolvable:$true] %s153
          %159 = dma.hbm_to_vmem [thread:$0]  %s1, 256, %s154, [#allocation3], 128, 128, 8
        $region16: #{tpu_custom_call.1} parent=11 // pred_fallthru
          _
        // Predicated region
        $region17: #{tpu_custom_call.1} parent=11 // pred_check
          %p160 = pneg %p80
        $region18: #{tpu_custom_call.1} parent=11 // pred_check_branch
          %162 = sbr.rel (%p160) target = $region20
        $region19: #{tpu_custom_call.1} parent=11 // pred_region
          _
        $region20: #{tpu_custom_call.1} parent=11 // pred_fallthru
          _
      $region12: #{tpu_custom_call.1} parent=5 // pred_fallthru
        _
      %p163 = scmp.lt.s32.totalorder %s12, 2
      // Predicated region
      $region21: #{tpu_custom_call.1} parent=5 // pred_check
        %p164 = pneg %p163
      $region22: #{tpu_custom_call.1} parent=5 // pred_check_branch
        %166 = sbr.rel (%p164) target = $region24
      $region23: #{tpu_custom_call.1} parent=5 // pred_region
        // Predicated region
        $region25: #{tpu_custom_call.1} parent=23 // pred_check
          %p167 = pneg %p32
        $region26: #{tpu_custom_call.1} parent=23 // pred_check_branch
          %169 = sbr.rel (%p167) target = $region28
        $region27: #{tpu_custom_call.1} parent=23 // pred_region
          %p170 = scmp.lt.s32.totalorder %s12, 1
          %s171 = scalar_select %p170, %s12, 1
          %s172 = smul.addr %s171, 8
          %s173 = scalar_lea.vmem %s0, %s172
        $region28: #{tpu_custom_call.1} parent=23 // pred_fallthru
          _
      $region24: #{tpu_custom_call.1} parent=5 // pred_fallthru
        _
      %p174 = scmp.le.s32.totalorder 1, %s12
      %p175 = scmp.lt.s32.totalorder %s12, 3
      %p176 = pnand %p174, %p175
      %p177 = pneg %p176
      // Predicated region
      $region29: #{tpu_custom_call.1} parent=5 // pred_check
        _
      $region30: #{tpu_custom_call.1} parent=5 // pred_check_branch
        %179 = sbr.rel (%p176) target = $region32
      $region31: #{tpu_custom_call.1} parent=5 // pred_region
        %s180 = ssub.s32 %s12, 1
        // Predicated region
        $region33: #{tpu_custom_call.1} parent=31 // pred_check
          %p181 = pneg %p59
        $region34: #{tpu_custom_call.1} parent=31 // pred_check_branch
          %183 = sbr.rel (%p181) target = $region36
        $region35: #{tpu_custom_call.1} parent=31 // pred_region
          %184 = dma.done [#allocation3], 256
        $region36: #{tpu_custom_call.1} parent=31 // pred_fallthru
          _
        %p185 = scmp.lt.s32.totalorder %s17, 1
        %s186 = scalar_select %p185, %s17, 1
        %s187 = smul.addr %s186, 8
        %s188 = scalar_lea.vmem %s0, %s187
        %p189 = pneg %p38
        %p190 = pneg %p35
        %p191 = pneg %p59
        %p192 = pneg %p56
        %p193 = pneg %p80
        %p194 = pneg %p77
        %p195 = pneg %p106
        %p196 = pneg %p103
        %p197 = scmp.lt.s32.totalorder %s17, 1
        %s198 = scalar_select %p197, %s17, 1
        %s199 = smul.addr %s198, 8
        %s200 = scalar_lea.vmem %s3, %s199
        %p201 = pneg %p132
        %p202 = pneg %p129
        %p203 = scmp.lt.s32.totalorder %s17, 1
        %s204 = scalar_select %p203, %s17, 1
        %s205 = smul.addr %s204, 8
        %s206 = scalar_lea.vmem %s4, %s205
        %p207 = scmp.lt.s32.totalorder %s17, 1
        %s208 = scalar_select %p207, %s17, 1
        %s209 = smul.addr %s208, 8
        %s210 = scalar_lea.vmem %s0, %s209
        %p211 = scmp.lt.s32.totalorder %s17, 1
        %s212 = scalar_select %p211, %s17, 1
        %s213 = smul.addr %s212, 8
        %s214 = scalar_lea.vmem %s3, %s213
        %p215 = scmp.lt.s32.totalorder %s17, 1
        %s216 = scalar_select %p215, %s17, 1
        %s217 = smul.addr %s216, 8
        %s218 = scalar_lea.vmem %s4, %s217
        %v219 = vld [vmem:[#allocation2] sm:$0xff]
        %v220 = vld [vmem:[#allocation2 + $0x8] sm:$0xff]
        %v221 = vld [vmem:[%s210] sm:$0xff]
        %vm222 = vcmask 261120
        %v224 = vsel %vm222, %v219, 0
        %v227 = vsel %vm222, %v220, 0
        %v230 = vsel %vm222, %v221, 0
        %232 = vmatprep.subr.mxu0 0.0
        %233 = vmatpush1.xpose.msra.mxu0 0.0
        %234 = vmatprep.subr.mxu0 0.0
        %235 = vmatpush1.xpose.msra.mxu0 0.0
        %236 = vmatprep.subr.mxu0 0.0
        %237 = vmatpush1.xpose.msra.mxu0 0.0
        %238 = vmatprep.subr.mxu0 0.0
        %239 = vmatpush1.xpose.msra.mxu0 0.0
        %240 = vmatprep.subr.mxu0 0.0
        %241 = vmatpush1.xpose.msra.mxu0 0.0
        %242 = vmatprep.subr.mxu0 0.0
        %243 = vmatpush1.xpose.msra.mxu0 0.0
        %244 = vmatprep.subr.mxu0 0.0
        %245 = vmatpush1.xpose.msra.mxu0 0.0
        %246 = vmatprep.subr.mxu0 0.0
        %247 = vmatpush1.xpose.msra.mxu0 0.0
        %248 = vmatprep.subr.mxu0 0.0
        %249 = vmatpush1.xpose.msra.mxu0 0.0
        %250 = vmatprep.subr.mxu0 0.0
        %251 = vmatpush1.xpose.msra.mxu0 0.0
        %252 = vmatprep.subr.mxu0 0.0
        %253 = vmatpush1.xpose.msra.mxu0 0.0
        %254 = vmatprep.subr.mxu0 0.0
        %255 = vmatpush1.xpose.msra.mxu0 0.0
        %256 = vmatprep.subr.mxu0 0.0
        %257 = vmatpush1.xpose.msra.mxu0 0.0
        %258 = vmatprep.subr.mxu0 0.0
        %259 = vmatpush1.xpose.msra.mxu0 0.0
        %260 = vmatprep.subr.mxu0 0.0
        %261 = vmatpush1.xpose.msra.mxu0 0.0
        %262 = vmatprep.subr.mxu0 0.0
        %263 = vmatpush1.xpose.msra.mxu0 %v230
        %264 = vmatprep.subr.mxu0 0.0
        %265 = vmatpush2.xpose.msra.mxu0 0.0
        %266 = vmatprep.subr.mxu0 0.0
        %267 = vmatpush2.xpose.msra.mxu0 0.0
        %268 = vmatprep.subr.mxu0 0.0
        %269 = vmatpush2.xpose.msra.mxu0 0.0
        %270 = vmatprep.subr.mxu0 0.0
        %271 = vmatpush2.xpose.msra.mxu0 0.0
        %272 = vmatprep.subr.mxu0 0.0
        %273 = vmatpush2.xpose.msra.mxu0 0.0
        %274 = vmatprep.subr.mxu0 0.0
        %275 = vmatpush2.xpose.msra.mxu0 0.0
        %276 = vmatprep.subr.mxu0 0.0
        %277 = vmatpush2.xpose.msra.mxu0 0.0
        %278 = vmatprep.subr.mxu0 0.0
        %279 = vmatpush2.xpose.msra.mxu0 0.0
        %280 = vmatprep.subr.mxu0 0.0
        %281 = vmatpush2.xpose.msra.mxu0 0.0
        %282 = vmatprep.subr.mxu0 0.0
        %283 = vmatpush2.xpose.msra.mxu0 0.0
        %284 = vmatprep.subr.mxu0 0.0
        %285 = vmatpush2.xpose.msra.mxu0 0.0
        %286 = vmatprep.subr.mxu0 0.0
        %287 = vmatpush2.xpose.msra.mxu0 0.0
        %288 = vmatprep.subr.mxu0 0.0
        %289 = vmatpush2.xpose.msra.mxu0 0.0
        %290 = vmatprep.subr.mxu0 0.0
        %291 = vmatpush2.xpose.msra.mxu0 0.0
        %292 = vmatprep.subr.mxu0 0.0
        %293 = vmatpush2.xpose.msra.mxu0 0.0
        %294 = vmatprep.subr.mxu0 0.0
        %295 = vmatpush2.xpose.msra.mxu0 0.0
        %296 = vmatprep.mubr.f32.mxu0 0.0
        %297 = vmatmul.mubr.f32.gmra.mxu0 %v224
        %v298 = vpop.f32.mrf.mxu0
        %v299 = vadd.f32 0.0, %v298
        %v300 = vpop.f32.mrf.mxu0
        %301 = vmatprep.mubr.f32.mxu0 0.0
        %302 = vmatmul.mubr.f32.gmra.mxu0 %v227
        %v303 = vpop.f32.mrf.mxu0
        %v304 = vadd.f32 0.0, %v303
        %v305 = vpop.f32.mrf.mxu0
        %306 = vdwg.mxu0
        %vm307 = vcmask 64512
        %v308 = vsel %vm307, %v299, -inf
        %v309 = vsel %vm307, %v304, -inf
        %v310 = vmax.f32 %v308, %v309
        %v311 = vrot.slane %v310, 4
        %v312 = vmax.f32 %v310, %v311
        %v313 = vrot.slane %v312, 2
        %v314 = vmax.f32 %v312, %v313
        %v315 = vrot.slane %v314, 1
        %v316 = vmax.f32 %v314, %v315
        %v317 = vsub.f32 %v299, %v316
        %v318 = vsub.f32 %v304, %v316
        %v319 = vmul.f32 %v317, 1.442695
        %v320 = vpow.pop %v319
        %v321 = vmul.f32 %v318, 1.442695
        %v322 = vpow.pop %v321
        %v323 = vsel %vm307, %v320, 0.0
        %v324 = vsel %vm307, %v322, 0.0
        %v325 = vadd.f32 %v323, %v324
        %v326 = vrot.slane %v325, 4
        %v327 = vadd.f32 %v325, %v326
        %v328 = vrot.slane %v327, 2
        %v329 = vadd.f32 %v327, %v328
        %v330 = vrot.slane %v329, 1
        %v331 = vadd.f32 %v329, %v330
        %v332 = vrcp.pop %v331
        %v333 = vmul.f32 %v320, %v332
        %v334 = vmul.f32 %v322, %v332
        %v335 = vld [vmem:[%s2] sm:$0xff]
        %v336 = vld [vmem:[%s2 + $0x8] sm:$0xff]
        %338 = vset.pattern.permute.xlu0 0
        %339 = vperm.xlu0 %338, %v335
        %v340 = vpop.permute.xlu0 %339
        %343 = vset.pattern.permute.xlu0 0
        %344 = vperm.xlu0 %343, %v336
        %v345 = vpop.permute.xlu0 %344
        %v347 = vadd.f32 %v333, %v340
        %v348 = vadd.f32 %v334, %v345
        %v349 = vlaneseq
        %v350 = vshrl.u32 %v349, 7
        %v351 = vadd.s32 %v350, 8
        %v352 = vsel %vm307, %v347, -inf
        %v353 = vsel %vm307, %v348, -inf
        %v354 = vmax.f32 %v352, %v353
        %v355 = vrot.slane %v354, 4
        %v356 = vmax.f32 %v354, %v355
        %v357 = vrot.slane %v356, 2
        %v358 = vmax.f32 %v356, %v357
        %v359 = vrot.slane %v358, 1
        %v360 = vmax.f32 %v358, %v359
        %vm361 = vcmp.eq.f32.partialorder %v347, %v360
        %vm362 = vcmp.eq.f32.partialorder %v348, %v360
        %v363 = vsel %vm361, %v350, 16
        %v364 = vsel %vm362, %v351, 16
        %v365 = vsel %vm307, %v363, 2147483647
        %v366 = vsel %vm307, %v364, 2147483647
        %vm367 = vcmp.lt.s32.totalorder %v365, %v366
        %v368 = vsel %vm367, %v365, %v366
        %v369 = vrot.slane %v368, 4
        %vm370 = vcmp.lt.s32.totalorder %v368, %v369
        %v371 = vsel %vm370, %v368, %v369
        %v372 = vrot.slane %v371, 2
        %vm373 = vcmp.lt.s32.totalorder %v371, %v372
        %v374 = vsel %vm373, %v371, %v372
        %v375 = vrot.slane %v374, 1
        %vm376 = vcmp.lt.s32.totalorder %v374, %v375
        %v377 = vsel %vm376, %v374, %v375
        %vm378 = vcmp.eq.s32.totalorder %v350, %v377
        %vm379 = vcmp.eq.s32.totalorder %v351, %v377
        %v380 = vsel %vm378, -inf, %v347
        %v381 = vsel %vm379, -inf, %v348
        %v382 = vsel %vm307, %v380, -inf
        %v383 = vsel %vm307, %v381, -inf
        %v384 = vmax.f32 %v382, %v383
        %v385 = vrot.slane %v384, 4
        %v386 = vmax.f32 %v384, %v385
        %v387 = vrot.slane %v386, 2
        %v388 = vmax.f32 %v386, %v387
        %v389 = vrot.slane %v388, 1
        %v390 = vmax.f32 %v388, %v389
        %vm391 = vcmp.eq.f32.partialorder %v380, %v390
        %vm392 = vcmp.eq.f32.partialorder %v381, %v390
        %v393 = vsel %vm391, %v350, 16
        %v394 = vsel %vm392, %v351, 16
        %v395 = vsel %vm307, %v393, 2147483647
        %v396 = vsel %vm307, %v394, 2147483647
        %vm397 = vcmp.lt.s32.totalorder %v395, %v396
        %v398 = vsel %vm397, %v395, %v396
        %v399 = vrot.slane %v398, 4
        %vm400 = vcmp.lt.s32.totalorder %v398, %v399
        %v401 = vsel %vm400, %v398, %v399
        %v402 = vrot.slane %v401, 2
        %vm403 = vcmp.lt.s32.totalorder %v401, %v402
        %v404 = vsel %vm403, %v401, %v402
        %v405 = vrot.slane %v404, 1
        %vm406 = vcmp.lt.s32.totalorder %v404, %v405
        %v407 = vsel %vm406, %v404, %v405
        %vm408 = vcmp.eq.s32.totalorder %v350, %v407
        %vm409 = vcmp.eq.s32.totalorder %v351, %v407
        %v410 = vsel %vm408, -inf, %v380
        %v411 = vsel %vm409, -inf, %v381
        %v412 = vsel %vm307, %v410, -inf
        %v413 = vsel %vm307, %v411, -inf
        %v414 = vmax.f32 %v412, %v413
        %v415 = vrot.slane %v414, 4
        %v416 = vmax.f32 %v414, %v415
        %v417 = vrot.slane %v416, 2
        %v418 = vmax.f32 %v416, %v417
        %v419 = vrot.slane %v418, 1
        %v420 = vmax.f32 %v418, %v419
        %vm421 = vcmp.eq.f32.partialorder %v410, %v420
        %vm422 = vcmp.eq.f32.partialorder %v411, %v420
        %v423 = vsel %vm421, %v350, 16
        %v424 = vsel %vm422, %v351, 16
        %v425 = vsel %vm307, %v423, 2147483647
        %v426 = vsel %vm307, %v424, 2147483647
        %vm427 = vcmp.lt.s32.totalorder %v425, %v426
        %v428 = vsel %vm427, %v425, %v426
        %v429 = vrot.slane %v428, 4
        %vm430 = vcmp.lt.s32.totalorder %v428, %v429
        %v431 = vsel %vm430, %v428, %v429
        %v432 = vrot.slane %v431, 2
        %vm433 = vcmp.lt.s32.totalorder %v431, %v432
        %v434 = vsel %vm433, %v431, %v432
        %v435 = vrot.slane %v434, 1
        %vm436 = vcmp.lt.s32.totalorder %v434, %v435
        %v437 = vsel %vm436, %v434, %v435
        %vm438 = vcmp.eq.s32.totalorder %v350, %v437
        %vm439 = vcmp.eq.s32.totalorder %v351, %v437
        %v440 = vsel %vm438, -inf, %v410
        %v441 = vsel %vm439, -inf, %v411
        %v442 = vsel %vm307, %v440, -inf
        %v443 = vsel %vm307, %v441, -inf
        %v444 = vmax.f32 %v442, %v443
        %v445 = vrot.slane %v444, 4
        %v446 = vmax.f32 %v444, %v445
        %v447 = vrot.slane %v446, 2
        %v448 = vmax.f32 %v446, %v447
        %v449 = vrot.slane %v448, 1
        %v450 = vmax.f32 %v448, %v449
        %vm451 = vcmp.eq.f32.partialorder %v440, %v450
        %vm452 = vcmp.eq.f32.partialorder %v441, %v450
        %v453 = vsel %vm451, %v350, 16
        %v454 = vsel %vm452, %v351, 16
        %v455 = vsel %vm307, %v453, 2147483647
        %v456 = vsel %vm307, %v454, 2147483647
        %vm457 = vcmp.lt.s32.totalorder %v455, %v456
        %v458 = vsel %vm457, %v455, %v456
        %v459 = vrot.slane %v458, 4
        %vm460 = vcmp.lt.s32.totalorder %v458, %v459
        %v461 = vsel %vm460, %v458, %v459
        %v462 = vrot.slane %v461, 2
        %vm463 = vcmp.lt.s32.totalorder %v461, %v462
        %v464 = vsel %vm463, %v461, %v462
        %v465 = vrot.slane %v464, 1
        %vm466 = vcmp.lt.s32.totalorder %v464, %v465
        %v467 = vsel %vm466, %v464, %v465
        %vm468 = vcmp.eq.s32.totalorder %v350, %v467
        %vm469 = vcmp.eq.s32.totalorder %v351, %v467
        %v470 = vsel %vm468, -inf, %v440
        %v471 = vsel %vm469, -inf, %v441
        %v472 = vsel %vm307, %v470, -inf
        %v473 = vsel %vm307, %v471, -inf
        %v474 = vmax.f32 %v472, %v473
        %v475 = vrot.slane %v474, 4
        %v476 = vmax.f32 %v474, %v475
        %v477 = vrot.slane %v476, 2
        %v478 = vmax.f32 %v476, %v477
        %v479 = vrot.slane %v478, 1
        %v480 = vmax.f32 %v478, %v479
        %vm481 = vcmp.eq.f32.partialorder %v470, %v480
        %vm482 = vcmp.eq.f32.partialorder %v471, %v480
        %v483 = vsel %vm481, %v350, 16
        %v484 = vsel %vm482, %v351, 16
        %v485 = vsel %vm307, %v483, 2147483647
        %v486 = vsel %vm307, %v484, 2147483647
        %vm487 = vcmp.lt.s32.totalorder %v485, %v486
        %v488 = vsel %vm487, %v485, %v486
        %v489 = vrot.slane %v488, 4
        %vm490 = vcmp.lt.s32.totalorder %v488, %v489
        %v491 = vsel %vm490, %v488, %v489
        %v492 = vrot.slane %v491, 2
        %vm493 = vcmp.lt.s32.totalorder %v491, %v492
        %v494 = vsel %vm493, %v491, %v492
        %v495 = vrot.slane %v494, 1
        %vm496 = vcmp.lt.s32.totalorder %v494, %v495
        %v497 = vsel %vm496, %v494, %v495
        %vm498 = vcmp.eq.s32.totalorder %v350, %v497
        %vm499 = vcmp.eq.s32.totalorder %v351, %v497
        %v500 = vsel %vm498, -inf, %v470
        %v501 = vsel %vm499, -inf, %v471
        %v502 = vsel %vm307, %v500, -inf
        %v503 = vsel %vm307, %v501, -inf
        %v504 = vmax.f32 %v502, %v503
        %v505 = vrot.slane %v504, 4
        %v506 = vmax.f32 %v504, %v505
        %v507 = vrot.slane %v506, 2
        %v508 = vmax.f32 %v506, %v507
        %v509 = vrot.slane %v508, 1
        %v510 = vmax.f32 %v508, %v509
        %vm511 = vcmp.eq.f32.partialorder %v500, %v510
        %vm512 = vcmp.eq.f32.partialorder %v501, %v510
        %v513 = vsel %vm511, %v350, 16
        %v514 = vsel %vm512, %v351, 16
        %v515 = vsel %vm307, %v513, 2147483647
        %v516 = vsel %vm307, %v514, 2147483647
        %vm517 = vcmp.lt.s32.totalorder %v515, %v516
        %v518 = vsel %vm517, %v515, %v516
        %v519 = vrot.slane %v518, 4
        %vm520 = vcmp.lt.s32.totalorder %v518, %v519
        %v521 = vsel %vm520, %v518, %v519
        %v522 = vrot.slane %v521, 2
        %vm523 = vcmp.lt.s32.totalorder %v521, %v522
        %v524 = vsel %vm523, %v521, %v522
        %v525 = vrot.slane %v524, 1
        %vm526 = vcmp.lt.s32.totalorder %v524, %v525
        %v527 = vsel %vm526, %v524, %v525
        %vm528 = vcmp.eq.s32.totalorder %v350, %v527
        %vm529 = vcmp.eq.s32.totalorder %v351, %v527
        %v530 = vsel %vm528, -inf, %v500
        %v531 = vsel %vm529, -inf, %v501
        %v532 = vsel %vm307, %v530, -inf
        %v533 = vsel %vm307, %v531, -inf
        %v534 = vmax.f32 %v532, %v533
        %v535 = vrot.slane %v534, 4
        %v536 = vmax.f32 %v534, %v535
        %v537 = vrot.slane %v536, 2
        %v538 = vmax.f32 %v536, %v537
        %v539 = vrot.slane %v538, 1
        %v540 = vmax.f32 %v538, %v539
        %vm541 = vcmp.eq.f32.partialorder %v530, %v540
        %vm542 = vcmp.eq.f32.partialorder %v531, %v540
        %v543 = vsel %vm541, %v350, 16
        %v544 = vsel %vm542, %v351, 16
        %v545 = vsel %vm307, %v543, 2147483647
        %v546 = vsel %vm307, %v544, 2147483647
        %vm547 = vcmp.lt.s32.totalorder %v545, %v546
        %v548 = vsel %vm547, %v545, %v546
        %v549 = vrot.slane %v548, 4
        %vm550 = vcmp.lt.s32.totalorder %v548, %v549
        %v551 = vsel %vm550, %v548, %v549
        %v552 = vrot.slane %v551, 2
        %vm553 = vcmp.lt.s32.totalorder %v551, %v552
        %v554 = vsel %vm553, %v551, %v552
        %v555 = vrot.slane %v554, 1
        %vm556 = vcmp.lt.s32.totalorder %v554, %v555
        %v557 = vsel %vm556, %v554, %v555
        %vm558 = vcmp.eq.s32.totalorder %v350, %v557
        %vm559 = vcmp.eq.s32.totalorder %v351, %v557
        %v560 = vsel %vm558, -inf, %v530
        %v561 = vsel %vm559, -inf, %v531
        %v562 = vsel %vm307, %v560, -inf
        %v563 = vsel %vm307, %v561, -inf
        %v564 = vmax.f32 %v562, %v563
        %v565 = vrot.slane %v564, 4
        %v566 = vmax.f32 %v564, %v565
        %v567 = vrot.slane %v566, 2
        %v568 = vmax.f32 %v566, %v567
        %v569 = vrot.slane %v568, 1
        %v570 = vmax.f32 %v568, %v569
        %vm571 = vcmp.eq.f32.partialorder %v560, %v570
        %vm572 = vcmp.eq.f32.partialorder %v561, %v570
        %v573 = vsel %vm571, %v350, 16
        %v574 = vsel %vm572, %v351, 16
        %v575 = vsel %vm307, %v573, 2147483647
        %v576 = vsel %vm307, %v574, 2147483647
        %vm577 = vcmp.lt.s32.totalorder %v575, %v576
        %v578 = vsel %vm577, %v575, %v576
        %v579 = vrot.slane %v578, 4
        %vm580 = vcmp.lt.s32.totalorder %v578, %v579
        %v581 = vsel %vm580, %v578, %v579
        %v582 = vrot.slane %v581, 2
        %vm583 = vcmp.lt.s32.totalorder %v581, %v582
        %v584 = vsel %vm583, %v581, %v582
        %v585 = vrot.slane %v584, 1
        %vm586 = vcmp.lt.s32.totalorder %v584, %v585
        %v587 = vsel %vm586, %v584, %v585
        %vm588 = vcmask 1040384
        %v589 = vsel %vm588, %v360, %v390
        %vm590 = vcmask 1041408
        %v591 = vsel %vm590, %v589, %v420
        %vm592 = vcmask 1042432
        %v593 = vsel %vm592, %v591, %v450
        %vm594 = vcmask 1043456
        %v595 = vsel %vm594, %v593, %v480
        %vm596 = vcmask 1044480
        %v597 = vsel %vm596, %v595, %v510
        %vm598 = vcmask 1045504
        %v599 = vsel %vm598, %v597, %v540
        %vm600 = vcmask 1046528
        %v601 = vsel %vm600, %v599, %v570
        %v602 = vsel %vm588, %v377, %v407
        %v603 = vsel %vm590, %v602, %v437
        %v604 = vsel %vm592, %v603, %v467
        %v605 = vsel %vm594, %v604, %v497
        %v606 = vsel %vm596, %v605, %v527
        %v607 = vsel %vm598, %v606, %v557
        %v608 = vsel %vm600, %v607, %v587
        %609 = vxpose.xlu0.b32.start [1/16] %v601, 128
        %610 = vxpose.xlu0.b32.cont [2/16] 0.0, 128
        %611 = vxpose.xlu0.b32.cont [3/16] 0.0, 128
        %612 = vxpose.xlu0.b32.cont [4/16] 0.0, 128
        %613 = vxpose.xlu0.b32.cont [5/16] 0.0, 128
        %614 = vxpose.xlu0.b32.cont [6/16] 0.0, 128
        %615 = vxpose.xlu0.b32.cont [7/16] 0.0, 128
        %616 = vxpose.xlu0.b32.cont [8/16] 0.0, 128
        %617 = vxpose.xlu0.b32.cont [9/16] 0.0, 128
        %618 = vxpose.xlu0.b32.cont [10/16] 0.0, 128
        %619 = vxpose.xlu0.b32.cont [11/16] 0.0, 128
        %620 = vxpose.xlu0.b32.cont [12/16] 0.0, 128
        %621 = vxpose.xlu0.b32.cont [13/16] 0.0, 128
        %622 = vxpose.xlu0.b32.cont [14/16] 0.0, 128
        %623 = vxpose.xlu0.b32.cont [15/16] 0.0, 128
        %624 = vxpose.xlu0.b32.end [16/16] 0.0, 128
        %v625 = vpop.trf.xlu0
        %v626 = vpop.trf.xlu0
        %v627 = vpop.trf.xlu0
        %v628 = vpop.trf.xlu0
        %v629 = vpop.trf.xlu0
        %v630 = vpop.trf.xlu0
        %v631 = vpop.trf.xlu0
        %v632 = vpop.trf.xlu0
        %v633 = vpop.trf.xlu0
        %v634 = vpop.trf.xlu0
        %v635 = vpop.trf.xlu0
        %v636 = vpop.trf.xlu0
        %v637 = vpop.trf.xlu0
        %v638 = vpop.trf.xlu0
        %v639 = vpop.trf.xlu0
        %v640 = vpop.trf.xlu0
        %641 = vst.msk [vmem:[%s214] sm:$0xff] %vm307, %v625
        %642 = vxpose.xlu0.b32.start [1/16] %v608, 128
        %643 = vxpose.xlu0.b32.cont [2/16] 0, 128
        %644 = vxpose.xlu0.b32.cont [3/16] 0, 128
        %645 = vxpose.xlu0.b32.cont [4/16] 0, 128
        %646 = vxpose.xlu0.b32.cont [5/16] 0, 128
        %647 = vxpose.xlu0.b32.cont [6/16] 0, 128
        %648 = vxpose.xlu0.b32.cont [7/16] 0, 128
        %649 = vxpose.xlu0.b32.cont [8/16] 0, 128
        %650 = vxpose.xlu0.b32.cont [9/16] 0, 128
        %651 = vxpose.xlu0.b32.cont [10/16] 0, 128
        %652 = vxpose.xlu0.b32.cont [11/16] 0, 128
        %653 = vxpose.xlu0.b32.cont [12/16] 0, 128
        %654 = vxpose.xlu0.b32.cont [13/16] 0, 128
        %655 = vxpose.xlu0.b32.cont [14/16] 0, 128
        %656 = vxpose.xlu0.b32.cont [15/16] 0, 128
        %657 = vxpose.xlu0.b32.end [16/16] 0, 128
        %v658 = vpop.trf.xlu0
        %v659 = vpop.trf.xlu0
        %v660 = vpop.trf.xlu0
        %v661 = vpop.trf.xlu0
        %v662 = vpop.trf.xlu0
        %v663 = vpop.trf.xlu0
        %v664 = vpop.trf.xlu0
        %v665 = vpop.trf.xlu0
        %v666 = vpop.trf.xlu0
        %v667 = vpop.trf.xlu0
        %v668 = vpop.trf.xlu0
        %v669 = vpop.trf.xlu0
        %v670 = vpop.trf.xlu0
        %v671 = vpop.trf.xlu0
        %v672 = vpop.trf.xlu0
        %v673 = vpop.trf.xlu0
        %674 = vst.msk [vmem:[%s218] sm:$0xff] %vm307, %v658
        %p675 = scmp.lt.s32.totalorder %s17, 1
        %s676 = scalar_select %p675, %s17, 1
        %s677 = smul.addr %s676, 8
        %s678 = scalar_lea.vmem %s3, %s677
        %p679 = scmp.lt.s32.totalorder %s17, 1
        %s680 = scalar_select %p679, %s17, 1
        %s681 = smul.addr %s680, 8
        %s682 = scalar_lea.vmem %s4, %s681
        // Predicated region
        $region37: #{tpu_custom_call.1} parent=31 // pred_check
          %p683 = pneg %p103
        $region38: #{tpu_custom_call.1} parent=31 // pred_check_branch
          %685 = sbr.rel (%p683) target = $region40
        $region39: #{tpu_custom_call.1} parent=31 // pred_region
          _
        $region40: #{tpu_custom_call.1} parent=31 // pred_fallthru
          _
        // Predicated region
        $region41: #{tpu_custom_call.1} parent=31 // pred_check
          %p686 = pneg %p129
        $region42: #{tpu_custom_call.1} parent=31 // pred_check_branch
          %688 = sbr.rel (%p686) target = $region44
        $region43: #{tpu_custom_call.1} parent=31 // pred_region
          _
        $region44: #{tpu_custom_call.1} parent=31 // pred_fallthru
          _
      $region32: #{tpu_custom_call.1} parent=5 // pred_fallthru
        _
      %p689 = scmp.le.s32.totalorder 2, %s12
      // Predicated region
      $region45: #{tpu_custom_call.1} parent=5 // pred_check
        %p690 = pneg %p689
      $region46: #{tpu_custom_call.1} parent=5 // pred_check_branch
        %692 = sbr.rel (%p690) target = $region48
      $region47: #{tpu_custom_call.1} parent=5 // pred_region
        %s693 = ssub.s32 %s12, 2
        // Predicated region
        $region49: #{tpu_custom_call.1} parent=47 // pred_check
          %p694 = pneg %p109
        $region50: #{tpu_custom_call.1} parent=47 // pred_check_branch
          %696 = sbr.rel (%p694) target = $region52
        $region51: #{tpu_custom_call.1} parent=47 // pred_region
          %p697 = scmp.lt.s32.totalorder %s18, 1
          %s698 = scalar_select %p697, %s18, 1
          %s699 = smul.addr %s698, 8
          %s700 = scalar_lea.vmem %s3, %s699
        $region52: #{tpu_custom_call.1} parent=47 // pred_fallthru
          _
        // Predicated region
        $region53: #{tpu_custom_call.1} parent=47 // pred_check
          %p701 = pneg %p135
        $region54: #{tpu_custom_call.1} parent=47 // pred_check_branch
          %703 = sbr.rel (%p701) target = $region56
        $region55: #{tpu_custom_call.1} parent=47 // pred_region
          %p704 = scmp.lt.s32.totalorder %s18, 1
          %s705 = scalar_select %p704, %s18, 1
          %s706 = smul.addr %s705, 8
          %s707 = scalar_lea.vmem %s4, %s706
        $region56: #{tpu_custom_call.1} parent=47 // pred_fallthru
          _
      $region48: #{tpu_custom_call.1} parent=5 // pred_fallthru
        _
    $region6: #{tpu_custom_call.1} parent=1 // loop_footer
      %s16 = sadd.s32 1, %s12
    $region7: #{tpu_custom_call.1} parent=1 // loop_footer_branch
      %11 = sbr.rel target = $region3
    $region8: #{tpu_custom_call.1} parent=1 // loop_exit
      _
    %708 = vsyncpa [#allocation3], 1
    %s709 = scalar_lea.sflag [#allocation3], 1
    %710 = vsyncpa %s709, 1

</llo_original>
